<compile_context>
chip_gen: v6e
topology: v6e:2x2x1
jax: 0.10.0
libtpu: 0.0.40
codegen_flags: <defaults>
</compile_context>

<pallas_src>
import jax
import jax.numpy as jnp
from jax.experimental import pallas as pl
from jax.experimental.pallas import tpu as pltpu


def ta_gru_kernel(xaug_ref, wh4_ref, wts_ref, wh_ref, wxaug_ref, b5_ref,
                  fcw_ref, fcb_ref, out_ref):
    B = out_ref.shape[0]
    H = wts_ref.shape[0]
    T = xaug_ref.shape[0] // B

    # Hoist all weight / bias loads out of the time loop (bf16 MXU operands).
    wh4 = wh4_ref[...]      # (H, 4H)   fused [W_sh | WTh | W_rh | W_zh], bf16
    wts = wts_ref[...]      # (H, H)    WTs, bf16
    w_h = wh_ref[...]       # (H, H)    W_h, bf16
    wxaug = wxaug_ref[...]  # (D+1, 5H) fused [W_sx|WTx|W_rx|W_zx|W_x ; W_st row], bf16
    b5 = b5_ref[...]        # (1, 5H)   fused [b_s | b_T | b_r | b_z | b], f32

    def mm(a, w):
        return jnp.dot(a.astype(jnp.bfloat16), w,
                       preferred_element_type=jnp.float32)

    # --- Prologue: all input projections for all timesteps in ONE matmul ---
    # xw_all[t*B:(t+1)*B, :] = x_t @ [W_sx|WTx|W_rx|W_zx|W_x] + dt @ [W_st|0..] + b5
    xw_all = mm(xaug_ref[...], wxaug) + b5          # (T*B, 5H) f32

    # --- Peeled step t = 0 (h0 == 0): h1 = sigmoid(xw_z) * tanh(xw_x) ---
    xw0 = xw_all[0:B]                                # (B, 5H)
    h = jax.nn.sigmoid(xw0[:, 3 * H:4 * H]) * jnp.tanh(xw0[:, 4 * H:5 * H])

    # --- Steps 1 .. T-1 (serial 3-matmul recurrence) ---
    for t in range(1, T):
        xw = xw_all[t * B:(t + 1) * B]               # (B, 5H)
        hw = mm(h, wh4)                              # (B, 4H) fused recurrent proj
        pre = hw + xw[:, :4 * H]                     # (B, 4H)

        s_t = jnp.tanh(pre[:, 0:H])
        r_t = jax.nn.sigmoid(pre[:, 2 * H:3 * H])
        z_t = jax.nn.sigmoid(pre[:, 3 * H:4 * H])
        T_t = jax.nn.sigmoid(pre[:, H:2 * H] + mm(s_t, wts))
        h_tilde = jnp.tanh(mm(r_t * h, w_h) + xw[:, 4 * H:5 * H])
        h = (1.0 - z_t) * (T_t * h) + z_t * h_tilde

    # --- Epilogue fc + sigmoid: VPU multiply + lane reduction (no MXU) ---
    logits = jnp.sum(h * fcw_ref[...], axis=-1, keepdims=True) + fcb_ref[...]
    out_ref[...] = jax.nn.sigmoid(logits)


def fraud_ta_gru_forward(x, delta, p):
    """x: (B, T, D) float32, delta: (B, T, 1) float32 -> (B, 1) float32."""
    B, T, D = x.shape
    H = p["W_sh"].shape[0]

    # Time-major layout + fold the delta column into x (x_aug: (T*B, D+1)).
    x_tm = jnp.transpose(x, (1, 0, 2)).astype(jnp.float32)        # (T, B, D)
    d_tm = jnp.transpose(delta, (1, 0, 2)).astype(jnp.float32)    # (T, B, 1)
    xaug = jnp.concatenate([x_tm, d_tm], axis=-1).reshape(T * B, D + 1)

    # Fuse independent gate weights into lane-dense matrices (bf16 MXU operands).
    wh4 = jnp.concatenate([p["W_sh"], p["WTh"], p["W_rh"], p["W_zh"]],
                          axis=1).astype(jnp.bfloat16)            # (H, 4H)
    wx5 = jnp.concatenate([p["W_sx"], p["WTx"], p["W_rx"], p["W_zx"],
                           p["W_x"]], axis=1)                     # (D, 5H)
    wst_row = jnp.concatenate(
        [p["W_st"], jnp.zeros((1, 4 * H), jnp.float32)], axis=1)  # (1, 5H)
    wxaug = jnp.concatenate([wx5, wst_row], axis=0).astype(jnp.bfloat16)  # (D+1, 5H)
    b5 = jnp.concatenate([p["b_s"], p["b_T"], p["b_r"], p["b_z"],
                          p["b"]], axis=0)[None, :]               # (1, 5H) f32
    wts = p["WTs"].astype(jnp.bfloat16)
    w_h = p["W_h"].astype(jnp.bfloat16)
    fcw_row = p["fcw"].T.astype(jnp.float32)                      # (1, H) f32
    fcb = p["fcb"].astype(jnp.float32)                            # (1, 1)

    vmem = pl.BlockSpec(memory_space=pltpu.MemorySpace.VMEM)
    # Total resident data < 60 KB: no grid, no pipelining needed.
    # TODO(synk): at production batch sizes add a leading batch-tile grid axis
    # with dimension_semantics=("parallel",) to use both v7x TensorCores.
    return pl.pallas_call(
        ta_gru_kernel,
        out_shape=jax.ShapeDtypeStruct((B, 1), jnp.float32),
        in_specs=[vmem] * 8,
        out_specs=vmem,
    )(xaug, wh4, wts, w_h, wxaug, b5, fcw_row, fcb)


def init_params(key, input_dim, hidden_dim):
    ks = jax.random.split(key, 13)
    s = 0.1
    n = jax.random.normal
    return {
        # hidden -> hidden (in, out)
        "W_sh": s * n(ks[0], (hidden_dim, hidden_dim), jnp.float32),
        "WTh": s * n(ks[1], (hidden_dim, hidden_dim), jnp.float32),
        "WTs": s * n(ks[2], (hidden_dim, hidden_dim), jnp.float32),
        "W_rh": s * n(ks[3], (hidden_dim, hidden_dim), jnp.float32),
        "W_zh": s * n(ks[4], (hidden_dim, hidden_dim), jnp.float32),
        "W_h": s * n(ks[5], (hidden_dim, hidden_dim), jnp.float32),
        # input -> hidden (in, out)
        "W_sx": s * n(ks[6], (input_dim, hidden_dim), jnp.float32),
        "WTx": s * n(ks[7], (input_dim, hidden_dim), jnp.float32),
        "W_rx": s * n(ks[8], (input_dim, hidden_dim), jnp.float32),
        "W_zx": s * n(ks[9], (input_dim, hidden_dim), jnp.float32),
        "W_x": s * n(ks[10], (input_dim, hidden_dim), jnp.float32),
        # time delta projection
        "W_st": s * n(ks[11], (1, hidden_dim), jnp.float32),
        # biases (zeros, like nn.Parameter(torch.zeros(H)))
        "b_s": jnp.zeros((hidden_dim,), jnp.float32),
        "b_T": jnp.zeros((hidden_dim,), jnp.float32),
        "b_r": jnp.zeros((hidden_dim,), jnp.float32),
        "b_z": jnp.zeros((hidden_dim,), jnp.float32),
        "b": jnp.zeros((hidden_dim,), jnp.float32),
        # final fc
        "fcw": s * n(ks[12], (hidden_dim, 1), jnp.float32),
        "fcb": jnp.zeros((1, 1), jnp.float32),
    }


def reference_forward(x, delta, p):
    """Pure-JAX f32 replica of the PyTorch forward for validation."""
    B, T, D = x.shape
    H = p["W_sh"].shape[0]
    h = jnp.zeros((B, H), jnp.float32)
    for t in range(T):
        xt = x[:, t, :]
        dt = delta[:, t, :]
        s_t = jnp.tanh(h @ p["W_sh"] + xt @ p["W_sx"] + dt @ p["W_st"]
                       + p["b_s"])
        T_t = jax.nn.sigmoid(h @ p["WTh"] + xt @ p["WTx"] + s_t @ p["WTs"]
                             + p["b_T"])
        r_t = jax.nn.sigmoid(h @ p["W_rh"] + xt @ p["W_rx"] + p["b_r"])
        z_t = jax.nn.sigmoid(h @ p["W_zh"] + xt @ p["W_zx"] + p["b_z"])
        h_tilde = jnp.tanh((r_t * h) @ p["W_h"] + xt @ p["W_x"] + p["b"])
        h = (1.0 - z_t) * (T_t * h) + z_t * h_tilde
    return jax.nn.sigmoid(h @ p["fcw"] + p["fcb"])


if __name__ == "__main__":
    B, T, D, H = 8, 8, 16, 32   # batch, seq_len, input_size, hidden_size

    key = jax.random.PRNGKey(0)
    kx, kd, kp = jax.random.split(key, 3)
    x = jax.random.normal(kx, (B, T, D), jnp.float32)
    delta = jax.random.uniform(kd, (B, T, 1), jnp.float32)  # time deltas >= 0
    params = init_params(kp, D, H)

    out = fraud_ta_gru_forward(x, delta, params)
    out = jax.block_until_ready(out)

    ref = reference_forward(x, delta, params)
    assert out.shape == (B, 1)
    # bf16 MXU operands in the kernel (f32 reference): tolerance relaxed to 5e-3.
    assert jnp.allclose(out, ref, atol=5e-3, rtol=5e-3), (out, ref)

    print("KERNEL_OK")
</pallas_src>

<mosaic_0001>
module attributes {stable_mosaic.version = 11 : i64} {
  func.func @ta_gru_kernel(%arg0: memref<64x17xf32, #tpu.memory_space<vmem>>, %arg1: memref<32x128xbf16, #tpu.memory_space<vmem>>, %arg2: memref<32x32xbf16, #tpu.memory_space<vmem>>, %arg3: memref<32x32xbf16, #tpu.memory_space<vmem>>, %arg4: memref<17x160xbf16, #tpu.memory_space<vmem>>, %arg5: memref<1x160xf32, #tpu.memory_space<vmem>>, %arg6: memref<1x32xf32, #tpu.memory_space<vmem>>, %arg7: memref<1x1xf32, #tpu.memory_space<vmem>>, %arg8: memref<8x1xf32, #tpu.memory_space<vmem>>) attributes {dimension_semantics = [], scalar_prefetch = 0 : i64, scratch_operands = 0 : i64, tpu.core_type = #tpu.core_type<tc>} {
    %c0 = arith.constant 0 : index
    %c0_0 = arith.constant 0 : index
    %0 = vector.load %arg1[%c0, %c0_0] : memref<32x128xbf16, #tpu.memory_space<vmem>>, vector<32x128xbf16>
    %c0_1 = arith.constant 0 : index
    %c0_2 = arith.constant 0 : index
    %1 = vector.load %arg2[%c0_1, %c0_2] : memref<32x32xbf16, #tpu.memory_space<vmem>>, vector<32x32xbf16>
    %c0_3 = arith.constant 0 : index
    %c0_4 = arith.constant 0 : index
    %2 = vector.load %arg3[%c0_3, %c0_4] : memref<32x32xbf16, #tpu.memory_space<vmem>>, vector<32x32xbf16>
    %c0_5 = arith.constant 0 : index
    %c0_6 = arith.constant 0 : index
    %3 = vector.load %arg4[%c0_5, %c0_6] : memref<17x160xbf16, #tpu.memory_space<vmem>>, vector<17x160xbf16>
    %c0_7 = arith.constant 0 : index
    %c0_8 = arith.constant 0 : index
    %4 = vector.load %arg5[%c0_7, %c0_8] : memref<1x160xf32, #tpu.memory_space<vmem>>, vector<1x160xf32>
    %c0_9 = arith.constant 0 : index
    %c0_10 = arith.constant 0 : index
    %5 = vector.load %arg0[%c0_9, %c0_10] : memref<64x17xf32, #tpu.memory_space<vmem>>, vector<64x17xf32>
    %6 = arith.truncf %5 : vector<64x17xf32> to vector<64x17xbf16>
    %cst = arith.constant dense<0.000000e+00> : vector<64x160xf32>
    %7 = tpu.matmul %6, %3, %cst {dimension_numbers = #tpu.dot_dimension_numbers<[1], [0], [0], [1], [0, 0, 1, 1], [], []>} : vector<64x17xbf16>, vector<17x160xbf16>, vector<64x160xf32> -> vector<64x160xf32>
    %8 = vector.broadcast %4 : vector<1x160xf32> to vector<64x160xf32>
    %9 = arith.addf %7, %8 : vector<64x160xf32>
    %10 = vector.extract_strided_slice %9 {offsets = [0, 0], sizes = [8, 160], strides = [1, 1]} : vector<64x160xf32> to vector<8x160xf32>
    %11 = vector.extract_strided_slice %10 {offsets = [0, 96], sizes = [8, 32], strides = [1, 1]} : vector<8x160xf32> to vector<8x32xf32>
    %12 = arith.negf %11 : vector<8x32xf32>
    %13 = math.exp %12 : vector<8x32xf32>
    %cst_11 = arith.constant 1.000000e+00 : f32
    %14 = vector.broadcast %cst_11 : f32 to vector<8x32xf32>
    %15 = arith.addf %14, %13 : vector<8x32xf32>
    %16 = arith.divf %14, %15 : vector<8x32xf32>
    %17 = vector.extract_strided_slice %10 {offsets = [0, 128], sizes = [8, 32], strides = [1, 1]} : vector<8x160xf32> to vector<8x32xf32>
    %18 = math.tanh %17 : vector<8x32xf32>
    %19 = arith.mulf %16, %18 : vector<8x32xf32>
    %20 = vector.extract_strided_slice %9 {offsets = [8, 0], sizes = [8, 160], strides = [1, 1]} : vector<64x160xf32> to vector<8x160xf32>
    %21 = arith.truncf %19 : vector<8x32xf32> to vector<8x32xbf16>
    %cst_12 = arith.constant dense<0.000000e+00> : vector<8x128xf32>
    %22 = tpu.matmul %21, %0, %cst_12 {dimension_numbers = #tpu.dot_dimension_numbers<[1], [0], [0], [1], [0, 0, 1, 1], [], []>} : vector<8x32xbf16>, vector<32x128xbf16>, vector<8x128xf32> -> vector<8x128xf32>
    %23 = vector.extract_strided_slice %20 {offsets = [0, 0], sizes = [8, 128], strides = [1, 1]} : vector<8x160xf32> to vector<8x128xf32>
    %24 = arith.addf %22, %23 : vector<8x128xf32>
    %25 = vector.extract_strided_slice %24 {offsets = [0, 0], sizes = [8, 32], strides = [1, 1]} : vector<8x128xf32> to vector<8x32xf32>
    %26 = math.tanh %25 : vector<8x32xf32>
    %27 = vector.extract_strided_slice %24 {offsets = [0, 64], sizes = [8, 32], strides = [1, 1]} : vector<8x128xf32> to vector<8x32xf32>
    %28 = arith.negf %27 : vector<8x32xf32>
    %29 = math.exp %28 : vector<8x32xf32>
    %cst_13 = arith.constant 1.000000e+00 : f32
    %30 = vector.broadcast %cst_13 : f32 to vector<8x32xf32>
    %31 = arith.addf %30, %29 : vector<8x32xf32>
    %32 = arith.divf %30, %31 : vector<8x32xf32>
    %33 = vector.extract_strided_slice %24 {offsets = [0, 96], sizes = [8, 32], strides = [1, 1]} : vector<8x128xf32> to vector<8x32xf32>
    %34 = arith.negf %33 : vector<8x32xf32>
    %35 = math.exp %34 : vector<8x32xf32>
    %cst_14 = arith.constant 1.000000e+00 : f32
    %36 = vector.broadcast %cst_14 : f32 to vector<8x32xf32>
    %37 = arith.addf %36, %35 : vector<8x32xf32>
    %38 = arith.divf %36, %37 : vector<8x32xf32>
    %39 = vector.extract_strided_slice %24 {offsets = [0, 32], sizes = [8, 32], strides = [1, 1]} : vector<8x128xf32> to vector<8x32xf32>
    %40 = arith.truncf %26 : vector<8x32xf32> to vector<8x32xbf16>
    %cst_15 = arith.constant dense<0.000000e+00> : vector<8x32xf32>
    %41 = tpu.matmul %40, %1, %cst_15 {dimension_numbers = #tpu.dot_dimension_numbers<[1], [0], [0], [1], [0, 0, 1, 1], [], []>} : vector<8x32xbf16>, vector<32x32xbf16>, vector<8x32xf32> -> vector<8x32xf32>
    %42 = arith.addf %39, %41 : vector<8x32xf32>
    %43 = arith.negf %42 : vector<8x32xf32>
    %44 = math.exp %43 : vector<8x32xf32>
    %cst_16 = arith.constant 1.000000e+00 : f32
    %45 = vector.broadcast %cst_16 : f32 to vector<8x32xf32>
    %46 = arith.addf %45, %44 : vector<8x32xf32>
    %47 = arith.divf %45, %46 : vector<8x32xf32>
    %48 = arith.mulf %32, %19 : vector<8x32xf32>
    %49 = arith.truncf %48 : vector<8x32xf32> to vector<8x32xbf16>
    %cst_17 = arith.constant dense<0.000000e+00> : vector<8x32xf32>
    %50 = tpu.matmul %49, %2, %cst_17 {dimension_numbers = #tpu.dot_dimension_numbers<[1], [0], [0], [1], [0, 0, 1, 1], [], []>} : vector<8x32xbf16>, vector<32x32xbf16>, vector<8x32xf32> -> vector<8x32xf32>
    %51 = vector.extract_strided_slice %20 {offsets = [0, 128], sizes = [8, 32], strides = [1, 1]} : vector<8x160xf32> to vector<8x32xf32>
    %52 = arith.addf %50, %51 : vector<8x32xf32>
    %53 = math.tanh %52 : vector<8x32xf32>
    %cst_18 = arith.constant 1.000000e+00 : f32
    %54 = vector.broadcast %cst_18 : f32 to vector<8x32xf32>
    %55 = arith.subf %54, %38 : vector<8x32xf32>
    %56 = arith.mulf %47, %19 : vector<8x32xf32>
    %57 = arith.mulf %55, %56 : vector<8x32xf32>
    %58 = arith.mulf %38, %53 : vector<8x32xf32>
    %59 = arith.addf %57, %58 : vector<8x32xf32>
    %60 = vector.extract_strided_slice %9 {offsets = [16, 0], sizes = [8, 160], strides = [1, 1]} : vector<64x160xf32> to vector<8x160xf32>
    %61 = arith.truncf %59 : vector<8x32xf32> to vector<8x32xbf16>
    %cst_19 = arith.constant dense<0.000000e+00> : vector<8x128xf32>
    %62 = tpu.matmul %61, %0, %cst_19 {dimension_numbers = #tpu.dot_dimension_numbers<[1], [0], [0], [1], [0, 0, 1, 1], [], []>} : vector<8x32xbf16>, vector<32x128xbf16>, vector<8x128xf32> -> vector<8x128xf32>
    %63 = vector.extract_strided_slice %60 {offsets = [0, 0], sizes = [8, 128], strides = [1, 1]} : vector<8x160xf32> to vector<8x128xf32>
    %64 = arith.addf %62, %63 : vector<8x128xf32>
    %65 = vector.extract_strided_slice %64 {offsets = [0, 0], sizes = [8, 32], strides = [1, 1]} : vector<8x128xf32> to vector<8x32xf32>
    %66 = math.tanh %65 : vector<8x32xf32>
    %67 = vector.extract_strided_slice %64 {offsets = [0, 64], sizes = [8, 32], strides = [1, 1]} : vector<8x128xf32> to vector<8x32xf32>
    %68 = arith.negf %67 : vector<8x32xf32>
    %69 = math.exp %68 : vector<8x32xf32>
    %cst_20 = arith.constant 1.000000e+00 : f32
    %70 = vector.broadcast %cst_20 : f32 to vector<8x32xf32>
    %71 = arith.addf %70, %69 : vector<8x32xf32>
    %72 = arith.divf %70, %71 : vector<8x32xf32>
    %73 = vector.extract_strided_slice %64 {offsets = [0, 96], sizes = [8, 32], strides = [1, 1]} : vector<8x128xf32> to vector<8x32xf32>
    %74 = arith.negf %73 : vector<8x32xf32>
    %75 = math.exp %74 : vector<8x32xf32>
    %cst_21 = arith.constant 1.000000e+00 : f32
    %76 = vector.broadcast %cst_21 : f32 to vector<8x32xf32>
    %77 = arith.addf %76, %75 : vector<8x32xf32>
    %78 = arith.divf %76, %77 : vector<8x32xf32>
    %79 = vector.extract_strided_slice %64 {offsets = [0, 32], sizes = [8, 32], strides = [1, 1]} : vector<8x128xf32> to vector<8x32xf32>
    %80 = arith.truncf %66 : vector<8x32xf32> to vector<8x32xbf16>
    %cst_22 = arith.constant dense<0.000000e+00> : vector<8x32xf32>
    %81 = tpu.matmul %80, %1, %cst_22 {dimension_numbers = #tpu.dot_dimension_numbers<[1], [0], [0], [1], [0, 0, 1, 1], [], []>} : vector<8x32xbf16>, vector<32x32xbf16>, vector<8x32xf32> -> vector<8x32xf32>
    %82 = arith.addf %79, %81 : vector<8x32xf32>
    %83 = arith.negf %82 : vector<8x32xf32>
    %84 = math.exp %83 : vector<8x32xf32>
    %cst_23 = arith.constant 1.000000e+00 : f32
    %85 = vector.broadcast %cst_23 : f32 to vector<8x32xf32>
    %86 = arith.addf %85, %84 : vector<8x32xf32>
    %87 = arith.divf %85, %86 : vector<8x32xf32>
    %88 = arith.mulf %72, %59 : vector<8x32xf32>
    %89 = arith.truncf %88 : vector<8x32xf32> to vector<8x32xbf16>
    %cst_24 = arith.constant dense<0.000000e+00> : vector<8x32xf32>
    %90 = tpu.matmul %89, %2, %cst_24 {dimension_numbers = #tpu.dot_dimension_numbers<[1], [0], [0], [1], [0, 0, 1, 1], [], []>} : vector<8x32xbf16>, vector<32x32xbf16>, vector<8x32xf32> -> vector<8x32xf32>
    %91 = vector.extract_strided_slice %60 {offsets = [0, 128], sizes = [8, 32], strides = [1, 1]} : vector<8x160xf32> to vector<8x32xf32>
    %92 = arith.addf %90, %91 : vector<8x32xf32>
    %93 = math.tanh %92 : vector<8x32xf32>
    %cst_25 = arith.constant 1.000000e+00 : f32
    %94 = vector.broadcast %cst_25 : f32 to vector<8x32xf32>
    %95 = arith.subf %94, %78 : vector<8x32xf32>
    %96 = arith.mulf %87, %59 : vector<8x32xf32>
    %97 = arith.mulf %95, %96 : vector<8x32xf32>
    %98 = arith.mulf %78, %93 : vector<8x32xf32>
    %99 = arith.addf %97, %98 : vector<8x32xf32>
    %100 = vector.extract_strided_slice %9 {offsets = [24, 0], sizes = [8, 160], strides = [1, 1]} : vector<64x160xf32> to vector<8x160xf32>
    %101 = arith.truncf %99 : vector<8x32xf32> to vector<8x32xbf16>
    %cst_26 = arith.constant dense<0.000000e+00> : vector<8x128xf32>
    %102 = tpu.matmul %101, %0, %cst_26 {dimension_numbers = #tpu.dot_dimension_numbers<[1], [0], [0], [1], [0, 0, 1, 1], [], []>} : vector<8x32xbf16>, vector<32x128xbf16>, vector<8x128xf32> -> vector<8x128xf32>
    %103 = vector.extract_strided_slice %100 {offsets = [0, 0], sizes = [8, 128], strides = [1, 1]} : vector<8x160xf32> to vector<8x128xf32>
    %104 = arith.addf %102, %103 : vector<8x128xf32>
    %105 = vector.extract_strided_slice %104 {offsets = [0, 0], sizes = [8, 32], strides = [1, 1]} : vector<8x128xf32> to vector<8x32xf32>
    %106 = math.tanh %105 : vector<8x32xf32>
    %107 = vector.extract_strided_slice %104 {offsets = [0, 64], sizes = [8, 32], strides = [1, 1]} : vector<8x128xf32> to vector<8x32xf32>
    %108 = arith.negf %107 : vector<8x32xf32>
    %109 = math.exp %108 : vector<8x32xf32>
    %cst_27 = arith.constant 1.000000e+00 : f32
    %110 = vector.broadcast %cst_27 : f32 to vector<8x32xf32>
    %111 = arith.addf %110, %109 : vector<8x32xf32>
    %112 = arith.divf %110, %111 : vector<8x32xf32>
    %113 = vector.extract_strided_slice %104 {offsets = [0, 96], sizes = [8, 32], strides = [1, 1]} : vector<8x128xf32> to vector<8x32xf32>
    %114 = arith.negf %113 : vector<8x32xf32>
    %115 = math.exp %114 : vector<8x32xf32>
    %cst_28 = arith.constant 1.000000e+00 : f32
    %116 = vector.broadcast %cst_28 : f32 to vector<8x32xf32>
    %117 = arith.addf %116, %115 : vector<8x32xf32>
    %118 = arith.divf %116, %117 : vector<8x32xf32>
    %119 = vector.extract_strided_slice %104 {offsets = [0, 32], sizes = [8, 32], strides = [1, 1]} : vector<8x128xf32> to vector<8x32xf32>
    %120 = arith.truncf %106 : vector<8x32xf32> to vector<8x32xbf16>
    %cst_29 = arith.constant dense<0.000000e+00> : vector<8x32xf32>
    %121 = tpu.matmul %120, %1, %cst_29 {dimension_numbers = #tpu.dot_dimension_numbers<[1], [0], [0], [1], [0, 0, 1, 1], [], []>} : vector<8x32xbf16>, vector<32x32xbf16>, vector<8x32xf32> -> vector<8x32xf32>
    %122 = arith.addf %119, %121 : vector<8x32xf32>
    %123 = arith.negf %122 : vector<8x32xf32>
    %124 = math.exp %123 : vector<8x32xf32>
    %cst_30 = arith.constant 1.000000e+00 : f32
    %125 = vector.broadcast %cst_30 : f32 to vector<8x32xf32>
    %126 = arith.addf %125, %124 : vector<8x32xf32>
    %127 = arith.divf %125, %126 : vector<8x32xf32>
    %128 = arith.mulf %112, %99 : vector<8x32xf32>
    %129 = arith.truncf %128 : vector<8x32xf32> to vector<8x32xbf16>
    %cst_31 = arith.constant dense<0.000000e+00> : vector<8x32xf32>
    %130 = tpu.matmul %129, %2, %cst_31 {dimension_numbers = #tpu.dot_dimension_numbers<[1], [0], [0], [1], [0, 0, 1, 1], [], []>} : vector<8x32xbf16>, vector<32x32xbf16>, vector<8x32xf32> -> vector<8x32xf32>
    %131 = vector.extract_strided_slice %100 {offsets = [0, 128], sizes = [8, 32], strides = [1, 1]} : vector<8x160xf32> to vector<8x32xf32>
    %132 = arith.addf %130, %131 : vector<8x32xf32>
    %133 = math.tanh %132 : vector<8x32xf32>
    %cst_32 = arith.constant 1.000000e+00 : f32
    %134 = vector.broadcast %cst_32 : f32 to vector<8x32xf32>
    %135 = arith.subf %134, %118 : vector<8x32xf32>
    %136 = arith.mulf %127, %99 : vector<8x32xf32>
    %137 = arith.mulf %135, %136 : vector<8x32xf32>
    %138 = arith.mulf %118, %133 : vector<8x32xf32>
    %139 = arith.addf %137, %138 : vector<8x32xf32>
    %140 = vector.extract_strided_slice %9 {offsets = [32, 0], sizes = [8, 160], strides = [1, 1]} : vector<64x160xf32> to vector<8x160xf32>
    %141 = arith.truncf %139 : vector<8x32xf32> to vector<8x32xbf16>
    %cst_33 = arith.constant dense<0.000000e+00> : vector<8x128xf32>
    %142 = tpu.matmul %141, %0, %cst_33 {dimension_numbers = #tpu.dot_dimension_numbers<[1], [0], [0], [1], [0, 0, 1, 1], [], []>} : vector<8x32xbf16>, vector<32x128xbf16>, vector<8x128xf32> -> vector<8x128xf32>
    %143 = vector.extract_strided_slice %140 {offsets = [0, 0], sizes = [8, 128], strides = [1, 1]} : vector<8x160xf32> to vector<8x128xf32>
    %144 = arith.addf %142, %143 : vector<8x128xf32>
    %145 = vector.extract_strided_slice %144 {offsets = [0, 0], sizes = [8, 32], strides = [1, 1]} : vector<8x128xf32> to vector<8x32xf32>
    %146 = math.tanh %145 : vector<8x32xf32>
    %147 = vector.extract_strided_slice %144 {offsets = [0, 64], sizes = [8, 32], strides = [1, 1]} : vector<8x128xf32> to vector<8x32xf32>
    %148 = arith.negf %147 : vector<8x32xf32>
    %149 = math.exp %148 : vector<8x32xf32>
    %cst_34 = arith.constant 1.000000e+00 : f32
    %150 = vector.broadcast %cst_34 : f32 to vector<8x32xf32>
    %151 = arith.addf %150, %149 : vector<8x32xf32>
    %152 = arith.divf %150, %151 : vector<8x32xf32>
    %153 = vector.extract_strided_slice %144 {offsets = [0, 96], sizes = [8, 32], strides = [1, 1]} : vector<8x128xf32> to vector<8x32xf32>
    %154 = arith.negf %153 : vector<8x32xf32>
    %155 = math.exp %154 : vector<8x32xf32>
    %cst_35 = arith.constant 1.000000e+00 : f32
    %156 = vector.broadcast %cst_35 : f32 to vector<8x32xf32>
    %157 = arith.addf %156, %155 : vector<8x32xf32>
    %158 = arith.divf %156, %157 : vector<8x32xf32>
    %159 = vector.extract_strided_slice %144 {offsets = [0, 32], sizes = [8, 32], strides = [1, 1]} : vector<8x128xf32> to vector<8x32xf32>
    %160 = arith.truncf %146 : vector<8x32xf32> to vector<8x32xbf16>
    %cst_36 = arith.constant dense<0.000000e+00> : vector<8x32xf32>
    %161 = tpu.matmul %160, %1, %cst_36 {dimension_numbers = #tpu.dot_dimension_numbers<[1], [0], [0], [1], [0, 0, 1, 1], [], []>} : vector<8x32xbf16>, vector<32x32xbf16>, vector<8x32xf32> -> vector<8x32xf32>
    %162 = arith.addf %159, %161 : vector<8x32xf32>
    %163 = arith.negf %162 : vector<8x32xf32>
    %164 = math.exp %163 : vector<8x32xf32>
    %cst_37 = arith.constant 1.000000e+00 : f32
    %165 = vector.broadcast %cst_37 : f32 to vector<8x32xf32>
    %166 = arith.addf %165, %164 : vector<8x32xf32>
    %167 = arith.divf %165, %166 : vector<8x32xf32>
    %168 = arith.mulf %152, %139 : vector<8x32xf32>
    %169 = arith.truncf %168 : vector<8x32xf32> to vector<8x32xbf16>
    %cst_38 = arith.constant dense<0.000000e+00> : vector<8x32xf32>
    %170 = tpu.matmul %169, %2, %cst_38 {dimension_numbers = #tpu.dot_dimension_numbers<[1], [0], [0], [1], [0, 0, 1, 1], [], []>} : vector<8x32xbf16>, vector<32x32xbf16>, vector<8x32xf32> -> vector<8x32xf32>
    %171 = vector.extract_strided_slice %140 {offsets = [0, 128], sizes = [8, 32], strides = [1, 1]} : vector<8x160xf32> to vector<8x32xf32>
    %172 = arith.addf %170, %171 : vector<8x32xf32>
    %173 = math.tanh %172 : vector<8x32xf32>
    %cst_39 = arith.constant 1.000000e+00 : f32
    %174 = vector.broadcast %cst_39 : f32 to vector<8x32xf32>
    %175 = arith.subf %174, %158 : vector<8x32xf32>
    %176 = arith.mulf %167, %139 : vector<8x32xf32>
    %177 = arith.mulf %175, %176 : vector<8x32xf32>
    %178 = arith.mulf %158, %173 : vector<8x32xf32>
    %179 = arith.addf %177, %178 : vector<8x32xf32>
    %180 = vector.extract_strided_slice %9 {offsets = [40, 0], sizes = [8, 160], strides = [1, 1]} : vector<64x160xf32> to vector<8x160xf32>
    %181 = arith.truncf %179 : vector<8x32xf32> to vector<8x32xbf16>
    %cst_40 = arith.constant dense<0.000000e+00> : vector<8x128xf32>
    %182 = tpu.matmul %181, %0, %cst_40 {dimension_numbers = #tpu.dot_dimension_numbers<[1], [0], [0], [1], [0, 0, 1, 1], [], []>} : vector<8x32xbf16>, vector<32x128xbf16>, vector<8x128xf32> -> vector<8x128xf32>
    %183 = vector.extract_strided_slice %180 {offsets = [0, 0], sizes = [8, 128], strides = [1, 1]} : vector<8x160xf32> to vector<8x128xf32>
    %184 = arith.addf %182, %183 : vector<8x128xf32>
    %185 = vector.extract_strided_slice %184 {offsets = [0, 0], sizes = [8, 32], strides = [1, 1]} : vector<8x128xf32> to vector<8x32xf32>
    %186 = math.tanh %185 : vector<8x32xf32>
    %187 = vector.extract_strided_slice %184 {offsets = [0, 64], sizes = [8, 32], strides = [1, 1]} : vector<8x128xf32> to vector<8x32xf32>
    %188 = arith.negf %187 : vector<8x32xf32>
    %189 = math.exp %188 : vector<8x32xf32>
    %cst_41 = arith.constant 1.000000e+00 : f32
    %190 = vector.broadcast %cst_41 : f32 to vector<8x32xf32>
    %191 = arith.addf %190, %189 : vector<8x32xf32>
    %192 = arith.divf %190, %191 : vector<8x32xf32>
    %193 = vector.extract_strided_slice %184 {offsets = [0, 96], sizes = [8, 32], strides = [1, 1]} : vector<8x128xf32> to vector<8x32xf32>
    %194 = arith.negf %193 : vector<8x32xf32>
    %195 = math.exp %194 : vector<8x32xf32>
    %cst_42 = arith.constant 1.000000e+00 : f32
    %196 = vector.broadcast %cst_42 : f32 to vector<8x32xf32>
    %197 = arith.addf %196, %195 : vector<8x32xf32>
    %198 = arith.divf %196, %197 : vector<8x32xf32>
    %199 = vector.extract_strided_slice %184 {offsets = [0, 32], sizes = [8, 32], strides = [1, 1]} : vector<8x128xf32> to vector<8x32xf32>
    %200 = arith.truncf %186 : vector<8x32xf32> to vector<8x32xbf16>
    %cst_43 = arith.constant dense<0.000000e+00> : vector<8x32xf32>
    %201 = tpu.matmul %200, %1, %cst_43 {dimension_numbers = #tpu.dot_dimension_numbers<[1], [0], [0], [1], [0, 0, 1, 1], [], []>} : vector<8x32xbf16>, vector<32x32xbf16>, vector<8x32xf32> -> vector<8x32xf32>
    %202 = arith.addf %199, %201 : vector<8x32xf32>
    %203 = arith.negf %202 : vector<8x32xf32>
    %204 = math.exp %203 : vector<8x32xf32>
    %cst_44 = arith.constant 1.000000e+00 : f32
    %205 = vector.broadcast %cst_44 : f32 to vector<8x32xf32>
    %206 = arith.addf %205, %204 : vector<8x32xf32>
    %207 = arith.divf %205, %206 : vector<8x32xf32>
    %208 = arith.mulf %192, %179 : vector<8x32xf32>
    %209 = arith.truncf %208 : vector<8x32xf32> to vector<8x32xbf16>
    %cst_45 = arith.constant dense<0.000000e+00> : vector<8x32xf32>
    %210 = tpu.matmul %209, %2, %cst_45 {dimension_numbers = #tpu.dot_dimension_numbers<[1], [0], [0], [1], [0, 0, 1, 1], [], []>} : vector<8x32xbf16>, vector<32x32xbf16>, vector<8x32xf32> -> vector<8x32xf32>
    %211 = vector.extract_strided_slice %180 {offsets = [0, 128], sizes = [8, 32], strides = [1, 1]} : vector<8x160xf32> to vector<8x32xf32>
    %212 = arith.addf %210, %211 : vector<8x32xf32>
    %213 = math.tanh %212 : vector<8x32xf32>
    %cst_46 = arith.constant 1.000000e+00 : f32
    %214 = vector.broadcast %cst_46 : f32 to vector<8x32xf32>
    %215 = arith.subf %214, %198 : vector<8x32xf32>
    %216 = arith.mulf %207, %179 : vector<8x32xf32>
    %217 = arith.mulf %215, %216 : vector<8x32xf32>
    %218 = arith.mulf %198, %213 : vector<8x32xf32>
    %219 = arith.addf %217, %218 : vector<8x32xf32>
    %220 = vector.extract_strided_slice %9 {offsets = [48, 0], sizes = [8, 160], strides = [1, 1]} : vector<64x160xf32> to vector<8x160xf32>
    %221 = arith.truncf %219 : vector<8x32xf32> to vector<8x32xbf16>
    %cst_47 = arith.constant dense<0.000000e+00> : vector<8x128xf32>
    %222 = tpu.matmul %221, %0, %cst_47 {dimension_numbers = #tpu.dot_dimension_numbers<[1], [0], [0], [1], [0, 0, 1, 1], [], []>} : vector<8x32xbf16>, vector<32x128xbf16>, vector<8x128xf32> -> vector<8x128xf32>
    %223 = vector.extract_strided_slice %220 {offsets = [0, 0], sizes = [8, 128], strides = [1, 1]} : vector<8x160xf32> to vector<8x128xf32>
    %224 = arith.addf %222, %223 : vector<8x128xf32>
    %225 = vector.extract_strided_slice %224 {offsets = [0, 0], sizes = [8, 32], strides = [1, 1]} : vector<8x128xf32> to vector<8x32xf32>
    %226 = math.tanh %225 : vector<8x32xf32>
    %227 = vector.extract_strided_slice %224 {offsets = [0, 64], sizes = [8, 32], strides = [1, 1]} : vector<8x128xf32> to vector<8x32xf32>
    %228 = arith.negf %227 : vector<8x32xf32>
    %229 = math.exp %228 : vector<8x32xf32>
    %cst_48 = arith.constant 1.000000e+00 : f32
    %230 = vector.broadcast %cst_48 : f32 to vector<8x32xf32>
    %231 = arith.addf %230, %229 : vector<8x32xf32>
    %232 = arith.divf %230, %231 : vector<8x32xf32>
    %233 = vector.extract_strided_slice %224 {offsets = [0, 96], sizes = [8, 32], strides = [1, 1]} : vector<8x128xf32> to vector<8x32xf32>
    %234 = arith.negf %233 : vector<8x32xf32>
    %235 = math.exp %234 : vector<8x32xf32>
    %cst_49 = arith.constant 1.000000e+00 : f32
    %236 = vector.broadcast %cst_49 : f32 to vector<8x32xf32>
    %237 = arith.addf %236, %235 : vector<8x32xf32>
    %238 = arith.divf %236, %237 : vector<8x32xf32>
    %239 = vector.extract_strided_slice %224 {offsets = [0, 32], sizes = [8, 32], strides = [1, 1]} : vector<8x128xf32> to vector<8x32xf32>
    %240 = arith.truncf %226 : vector<8x32xf32> to vector<8x32xbf16>
    %cst_50 = arith.constant dense<0.000000e+00> : vector<8x32xf32>
    %241 = tpu.matmul %240, %1, %cst_50 {dimension_numbers = #tpu.dot_dimension_numbers<[1], [0], [0], [1], [0, 0, 1, 1], [], []>} : vector<8x32xbf16>, vector<32x32xbf16>, vector<8x32xf32> -> vector<8x32xf32>
    %242 = arith.addf %239, %241 : vector<8x32xf32>
    %243 = arith.negf %242 : vector<8x32xf32>
    %244 = math.exp %243 : vector<8x32xf32>
    %cst_51 = arith.constant 1.000000e+00 : f32
    %245 = vector.broadcast %cst_51 : f32 to vector<8x32xf32>
    %246 = arith.addf %245, %244 : vector<8x32xf32>
    %247 = arith.divf %245, %246 : vector<8x32xf32>
    %248 = arith.mulf %232, %219 : vector<8x32xf32>
    %249 = arith.truncf %248 : vector<8x32xf32> to vector<8x32xbf16>
    %cst_52 = arith.constant dense<0.000000e+00> : vector<8x32xf32>
    %250 = tpu.matmul %249, %2, %cst_52 {dimension_numbers = #tpu.dot_dimension_numbers<[1], [0], [0], [1], [0, 0, 1, 1], [], []>} : vector<8x32xbf16>, vector<32x32xbf16>, vector<8x32xf32> -> vector<8x32xf32>
    %251 = vector.extract_strided_slice %220 {offsets = [0, 128], sizes = [8, 32], strides = [1, 1]} : vector<8x160xf32> to vector<8x32xf32>
    %252 = arith.addf %250, %251 : vector<8x32xf32>
    %253 = math.tanh %252 : vector<8x32xf32>
    %cst_53 = arith.constant 1.000000e+00 : f32
    %254 = vector.broadcast %cst_53 : f32 to vector<8x32xf32>
    %255 = arith.subf %254, %238 : vector<8x32xf32>
    %256 = arith.mulf %247, %219 : vector<8x32xf32>
    %257 = arith.mulf %255, %256 : vector<8x32xf32>
    %258 = arith.mulf %238, %253 : vector<8x32xf32>
    %259 = arith.addf %257, %258 : vector<8x32xf32>
    %260 = vector.extract_strided_slice %9 {offsets = [56, 0], sizes = [8, 160], strides = [1, 1]} : vector<64x160xf32> to vector<8x160xf32>
    %261 = arith.truncf %259 : vector<8x32xf32> to vector<8x32xbf16>
    %cst_54 = arith.constant dense<0.000000e+00> : vector<8x128xf32>
    %262 = tpu.matmul %261, %0, %cst_54 {dimension_numbers = #tpu.dot_dimension_numbers<[1], [0], [0], [1], [0, 0, 1, 1], [], []>} : vector<8x32xbf16>, vector<32x128xbf16>, vector<8x128xf32> -> vector<8x128xf32>
    %263 = vector.extract_strided_slice %260 {offsets = [0, 0], sizes = [8, 128], strides = [1, 1]} : vector<8x160xf32> to vector<8x128xf32>
    %264 = arith.addf %262, %263 : vector<8x128xf32>
    %265 = vector.extract_strided_slice %264 {offsets = [0, 0], sizes = [8, 32], strides = [1, 1]} : vector<8x128xf32> to vector<8x32xf32>
    %266 = math.tanh %265 : vector<8x32xf32>
    %267 = vector.extract_strided_slice %264 {offsets = [0, 64], sizes = [8, 32], strides = [1, 1]} : vector<8x128xf32> to vector<8x32xf32>
    %268 = arith.negf %267 : vector<8x32xf32>
    %269 = math.exp %268 : vector<8x32xf32>
    %cst_55 = arith.constant 1.000000e+00 : f32
    %270 = vector.broadcast %cst_55 : f32 to vector<8x32xf32>
    %271 = arith.addf %270, %269 : vector<8x32xf32>
    %272 = arith.divf %270, %271 : vector<8x32xf32>
    %273 = vector.extract_strided_slice %264 {offsets = [0, 96], sizes = [8, 32], strides = [1, 1]} : vector<8x128xf32> to vector<8x32xf32>
    %274 = arith.negf %273 : vector<8x32xf32>
    %275 = math.exp %274 : vector<8x32xf32>
    %cst_56 = arith.constant 1.000000e+00 : f32
    %276 = vector.broadcast %cst_56 : f32 to vector<8x32xf32>
    %277 = arith.addf %276, %275 : vector<8x32xf32>
    %278 = arith.divf %276, %277 : vector<8x32xf32>
    %279 = vector.extract_strided_slice %264 {offsets = [0, 32], sizes = [8, 32], strides = [1, 1]} : vector<8x128xf32> to vector<8x32xf32>
    %280 = arith.truncf %266 : vector<8x32xf32> to vector<8x32xbf16>
    %cst_57 = arith.constant dense<0.000000e+00> : vector<8x32xf32>
    %281 = tpu.matmul %280, %1, %cst_57 {dimension_numbers = #tpu.dot_dimension_numbers<[1], [0], [0], [1], [0, 0, 1, 1], [], []>} : vector<8x32xbf16>, vector<32x32xbf16>, vector<8x32xf32> -> vector<8x32xf32>
    %282 = arith.addf %279, %281 : vector<8x32xf32>
    %283 = arith.negf %282 : vector<8x32xf32>
    %284 = math.exp %283 : vector<8x32xf32>
    %cst_58 = arith.constant 1.000000e+00 : f32
    %285 = vector.broadcast %cst_58 : f32 to vector<8x32xf32>
    %286 = arith.addf %285, %284 : vector<8x32xf32>
    %287 = arith.divf %285, %286 : vector<8x32xf32>
    %288 = arith.mulf %272, %259 : vector<8x32xf32>
    %289 = arith.truncf %288 : vector<8x32xf32> to vector<8x32xbf16>
    %cst_59 = arith.constant dense<0.000000e+00> : vector<8x32xf32>
    %290 = tpu.matmul %289, %2, %cst_59 {dimension_numbers = #tpu.dot_dimension_numbers<[1], [0], [0], [1], [0, 0, 1, 1], [], []>} : vector<8x32xbf16>, vector<32x32xbf16>, vector<8x32xf32> -> vector<8x32xf32>
    %291 = vector.extract_strided_slice %260 {offsets = [0, 128], sizes = [8, 32], strides = [1, 1]} : vector<8x160xf32> to vector<8x32xf32>
    %292 = arith.addf %290, %291 : vector<8x32xf32>
    %293 = math.tanh %292 : vector<8x32xf32>
    %cst_60 = arith.constant 1.000000e+00 : f32
    %294 = vector.broadcast %cst_60 : f32 to vector<8x32xf32>
    %295 = arith.subf %294, %278 : vector<8x32xf32>
    %296 = arith.mulf %287, %259 : vector<8x32xf32>
    %297 = arith.mulf %295, %296 : vector<8x32xf32>
    %298 = arith.mulf %278, %293 : vector<8x32xf32>
    %299 = arith.addf %297, %298 : vector<8x32xf32>
    %c0_61 = arith.constant 0 : index
    %c0_62 = arith.constant 0 : index
    %300 = vector.load %arg6[%c0_61, %c0_62] : memref<1x32xf32, #tpu.memory_space<vmem>>, vector<1x32xf32>
    %301 = vector.broadcast %300 : vector<1x32xf32> to vector<8x32xf32>
    %302 = arith.mulf %299, %301 : vector<8x32xf32>
    %cst_63 = arith.constant dense<0.000000e+00> : vector<8xf32>
    %303 = vector.multi_reduction <add>, %302, %cst_63 [1] : vector<8x32xf32> to vector<8xf32>
    %304 = vector.shape_cast %303 : vector<8xf32> to vector<8x1xf32>
    %c0_64 = arith.constant 0 : index
    %c0_65 = arith.constant 0 : index
    %305 = vector.load %arg7[%c0_64, %c0_65] : memref<1x1xf32, #tpu.memory_space<vmem>>, vector<1x1xf32>
    %306 = vector.broadcast %305 : vector<1x1xf32> to vector<8x1xf32>
    %307 = arith.addf %304, %306 : vector<8x1xf32>
    %308 = arith.negf %307 : vector<8x1xf32>
    %309 = math.exp %308 : vector<8x1xf32>
    %cst_66 = arith.constant 1.000000e+00 : f32
    %310 = vector.broadcast %cst_66 : f32 to vector<8x1xf32>
    %311 = arith.addf %310, %309 : vector<8x1xf32>
    %312 = arith.divf %310, %311 : vector<8x1xf32>
    %c0_67 = arith.constant 0 : index
    %c0_68 = arith.constant 0 : index
    %313 = vector.load %arg8[%c0_67, %c0_68] : memref<8x1xf32, #tpu.memory_space<vmem>>, vector<8x1xf32>
    tpu.vector_store %arg8[%c0_67, %c0_68], %312 {strides = array<i32>} : memref<8x1xf32, #tpu.memory_space<vmem>>, vector<8x1xf32>,
    return
  }
}

</mosaic_0001>

<llo_original>
// kernel: tpu_custom_call.1
$region0: #{tpu_custom_call.1}
  #allocation0 [shape = 'u32[]', space=smem, size = 0x4, offset = 0x4, fixed_abs, tag = 'smem constant byte address 0x4 - core index']
  #allocation1 [shape = 'u32[144,128]{1,0:T(1,128)}', space=vmem, size = 0x12000, scoped, tag = 'internal scratch']
  #allocation2 [shape = 'f32[1,1]{1,0:T(1,128)S(1)}', space=vmem, size = 0x200, scoped, tag = 'scoped memory for tpu_custom_call.1']
  %s0 = inlined_call_operand.vmem [shape: f32[64,17], index: 0, kind: input, shape index: {}]
  %s1 = inlined_call_operand.vmem [shape: bf16[32,128], index: 1, kind: input, shape index: {}]
  %s2 = inlined_call_operand.vmem [shape: bf16[32,32], index: 2, kind: input, shape index: {}]
  %s3 = inlined_call_operand.vmem [shape: bf16[32,32], index: 3, kind: input, shape index: {}]
  %s4 = inlined_call_operand.vmem [shape: bf16[17,160], index: 4, kind: input, shape index: {}]
  %s5 = inlined_call_operand.vmem [shape: f32[1,160], index: 5, kind: input, shape index: {}]
  %s6 = inlined_call_operand.vmem [shape: f32[1,32], index: 6, kind: input, shape index: {}]
  %s7 = inlined_call_operand.<no memory space> [shape: f32[1,1], index: 7, kind: input, shape index: {}]
  %s8 = inlined_call_operand.vmem [shape: f32[8,1], index: 8, kind: output, shape index: {}]
  %s9 = sld [smem:[#allocation0]]
  $region42: #{tpu_custom_call.1} parent=0
    _
  %s11 = ssub.s32 1, %s9
  %s12 = scalar_select 0, %s11, %s9
  %v13 = vstv %s7
  %14 = vst [vmem:[#allocation2] sm:$0x1] %v13
  // Predicated region
  $region2: #{tpu_custom_call.1} parent=0 // pred_check
    _
  $region3: #{tpu_custom_call.1} parent=0 // pred_check_branch
    %16 = sbr.rel (0) target = $region5
  $region4: #{tpu_custom_call.1} parent=0 // pred_region
    _
  $region5: #{tpu_custom_call.1} parent=0 // pred_fallthru
    _
  // Predicated region
  $region6: #{tpu_custom_call.1} parent=0 // pred_check
    _
  $region7: #{tpu_custom_call.1} parent=0 // pred_check_branch
    %18 = sbr.rel (0) target = $region9
  $region8: #{tpu_custom_call.1} parent=0 // pred_region
    _
  $region9: #{tpu_custom_call.1} parent=0 // pred_fallthru
    _
  // Predicated region
  $region10: #{tpu_custom_call.1} parent=0 // pred_check
    _
  $region11: #{tpu_custom_call.1} parent=0 // pred_check_branch
    %20 = sbr.rel (0) target = $region13
  $region12: #{tpu_custom_call.1} parent=0 // pred_region
    _
  $region13: #{tpu_custom_call.1} parent=0 // pred_fallthru
    _
  // Predicated region
  $region14: #{tpu_custom_call.1} parent=0 // pred_check
    _
  $region15: #{tpu_custom_call.1} parent=0 // pred_check_branch
    %22 = sbr.rel (0) target = $region17
  $region16: #{tpu_custom_call.1} parent=0 // pred_region
    _
  $region17: #{tpu_custom_call.1} parent=0 // pred_fallthru
    _
  // Predicated region
  $region18: #{tpu_custom_call.1} parent=0 // pred_check
    _
  $region19: #{tpu_custom_call.1} parent=0 // pred_check_branch
    %24 = sbr.rel (0) target = $region21
  $region20: #{tpu_custom_call.1} parent=0 // pred_region
    _
  $region21: #{tpu_custom_call.1} parent=0 // pred_fallthru
    _
  // Predicated region
  $region22: #{tpu_custom_call.1} parent=0 // pred_check
    _
  $region23: #{tpu_custom_call.1} parent=0 // pred_check_branch
    %26 = sbr.rel (0) target = $region25
  $region24: #{tpu_custom_call.1} parent=0 // pred_region
    _
  $region25: #{tpu_custom_call.1} parent=0 // pred_fallthru
    _
  // Predicated region
  $region26: #{tpu_custom_call.1} parent=0 // pred_check
    _
  $region27: #{tpu_custom_call.1} parent=0 // pred_check_branch
    %28 = sbr.rel (0) target = $region29
  $region28: #{tpu_custom_call.1} parent=0 // pred_region
    _
  $region29: #{tpu_custom_call.1} parent=0 // pred_fallthru
    _
  // Predicated region
  $region30: #{tpu_custom_call.1} parent=0 // pred_check
    _
  $region31: #{tpu_custom_call.1} parent=0 // pred_check_branch
    %30 = sbr.rel (0) target = $region33
  $region32: #{tpu_custom_call.1} parent=0 // pred_region
    _
  $region33: #{tpu_custom_call.1} parent=0 // pred_fallthru
    _
  %v32 = vld [vmem:[%s1] sm:$0xf]
  %v33 = vld [vmem:[%s1 + $0x4] sm:$0xf]
  %v34 = vld [vmem:[%s1 + $0x8] sm:$0xf]
  %v35 = vld [vmem:[%s1 + $0xc] sm:$0xf]
  %v36 = vld [vmem:[%s2] sm:$0xf]
  %v37 = vld [vmem:[%s2 + $0x4] sm:$0xf]
  %v38 = vld [vmem:[%s2 + $0x8] sm:$0xf]
  %v39 = vld [vmem:[%s2 + $0xc] sm:$0xf]
  %v40 = vld [vmem:[%s3] sm:$0xf]
  %v41 = vld [vmem:[%s3 + $0x4] sm:$0xf]
  %v42 = vld [vmem:[%s3 + $0x8] sm:$0xf]
  %v43 = vld [vmem:[%s3 + $0xc] sm:$0xf]
  %v44 = vld [vmem:[%s4] sm:$0xff]
  %v45 = vld [vmem:[%s4 + $0x8] sm:$0xff]
  %v46 = vld [vmem:[%s4 + $0x10] sm:$0x11]
  %v47 = vld [vmem:[%s5] sm:$0x3]
  %v48 = vld [vmem:[%s0] sm:$0xff]
  %v49 = vld [vmem:[%s0 + $0x8] sm:$0xff]
  %v50 = vld [vmem:[%s0 + $0x10] sm:$0xff]
  %v51 = vld [vmem:[%s0 + $0x18] sm:$0xff]
  %v52 = vld [vmem:[%s0 + $0x20] sm:$0xff]
  %v53 = vld [vmem:[%s0 + $0x28] sm:$0xff]
  %v54 = vld [vmem:[%s0 + $0x30] sm:$0xff]
  %v55 = vld [vmem:[%s0 + $0x38] sm:$0xff]
  %v56 = vpack.c.bf16 %v49, %v48
  %v57 = vpack.c.bf16 %v51, %v50
  %v58 = vpack.c.bf16 %v53, %v52
  %v59 = vpack.c.bf16 %v55, %v54
  %v61 = vlaneseq
  %v62 = vshrl.u32 %v61, 7
  %v63 = vsub.s32 0, %v62
  %v64 = vrot.slane %v47, %v63
  %v65 = vlaneseq
  %v66 = vshrl.u32 %v65, 7
  %v67 = vsub.s32 1, %v66
  %v68 = vrot.slane %v47, %v67
  %v74 = vunpack.c.l.b16 %v44
  %v75 = vunpack.c.h.b16 %v44
  %v76 = vunpack.c.l.b16 %v45
  %v77 = vunpack.c.h.b16 %v45
  %v78 = vunpack.c.l.b16 %v46
  %v79 = vunpack.c.h.b16 %v46
  %v80 = vpack.c.b16 %v76, %v74
  %v81 = vpack.c.b16 %v77, %v75
  %v82 = vpack.c.b16 %v78, %v78
  %v83 = vpack.c.b16 %v79, %v79
  %vm86 = vcmask 138240
  %v88 = vsel %vm86, %v56, 0
  %v91 = vsel %vm86, %v57, 0
  %v94 = vsel %vm86, %v58, 0
  %v97 = vsel %vm86, %v59, 0
  %vm99 = vcmask 1040384
  %v100 = vsel 0, 4294967295, 65535
  %v101 = vsel %vm99, %v100, 0
  %v103 = vand.u32 %v82, %v101
  %v106 = vand.u32 %v83, %v101
  %108 = vmatprep.subr.bf16.mxu0 0
  %109 = vmatpush1.bf16.msra.mxu0 0
  %110 = vmatprep.subr.bf16.mxu0 0
  %111 = vmatpush1.bf16.msra.mxu0 0
  %112 = vmatprep.subr.bf16.mxu0 0
  %113 = vmatpush1.bf16.msra.mxu0 0
  %114 = vmatprep.subr.bf16.mxu0 0
  %115 = vmatpush1.bf16.msra.mxu0 0
  %116 = vmatprep.subr.bf16.mxu0 0
  %117 = vmatpush1.bf16.msra.mxu0 0
  %118 = vmatprep.subr.bf16.mxu0 0
  %119 = vmatpush1.bf16.msra.mxu0 0
  %120 = vmatprep.subr.bf16.mxu0 %v106
  %121 = vmatpush1.bf16.msra.mxu0 %v103
  %122 = vmatprep.subr.bf16.mxu0 %v81
  %123 = vmatpush1.bf16.msra.mxu0 %v80
  %124 = vmatprep.subr.bf16.mxu0 0
  %125 = vmatpush2.bf16.msra.mxu0 0
  %126 = vmatprep.subr.bf16.mxu0 0
  %127 = vmatpush2.bf16.msra.mxu0 0
  %128 = vmatprep.subr.bf16.mxu0 0
  %129 = vmatpush2.bf16.msra.mxu0 0
  %130 = vmatprep.subr.bf16.mxu0 0
  %131 = vmatpush2.bf16.msra.mxu0 0
  %132 = vmatprep.subr.bf16.mxu0 0
  %133 = vmatpush2.bf16.msra.mxu0 0
  %134 = vmatprep.subr.bf16.mxu0 0
  %135 = vmatpush2.bf16.msra.mxu0 0
  %136 = vmatprep.subr.bf16.mxu0 0
  %137 = vmatpush2.bf16.msra.mxu0 0
  %138 = vmatprep.subr.bf16.mxu0 0
  %139 = vmatpush2.bf16.msra.mxu0 0
  %140 = vmatprep.mubr.bf16.mxu0 0
  %141 = vmatmul.mubr.bf16.gmra.mxu0 %v88
  %v142 = vpop.f32.mrf.mxu0
  %v143 = vadd.f32 %v64, %v142
  %v144 = vpop.f32.mrf.mxu0
  %v145 = vadd.f32 %v68, %v144
  %v146 = vpop.f32.mrf.mxu0
  %v147 = vadd.f32 %v64, %v146
  %v148 = vpop.f32.mrf.mxu0
  %v149 = vadd.f32 %v68, %v148
  %150 = vmatprep.mubr.bf16.mxu0 0
  %151 = vmatmul.mubr.bf16.gmra.mxu0 %v91
  %v152 = vpop.f32.mrf.mxu0
  %v153 = vadd.f32 %v64, %v152
  %v154 = vpop.f32.mrf.mxu0
  %v155 = vadd.f32 %v68, %v154
  %v156 = vpop.f32.mrf.mxu0
  %v157 = vadd.f32 %v64, %v156
  %v158 = vpop.f32.mrf.mxu0
  %v159 = vadd.f32 %v68, %v158
  %160 = vmatprep.mubr.bf16.mxu0 0
  %161 = vmatmul.mubr.bf16.gmra.mxu0 %v94
  %v162 = vpop.f32.mrf.mxu0
  %v163 = vadd.f32 %v64, %v162
  %v164 = vpop.f32.mrf.mxu0
  %v165 = vadd.f32 %v68, %v164
  %v166 = vpop.f32.mrf.mxu0
  %v167 = vadd.f32 %v64, %v166
  %v168 = vpop.f32.mrf.mxu0
  %v169 = vadd.f32 %v68, %v168
  %170 = vmatprep.mubr.bf16.mxu0 0
  %171 = vmatmul.mubr.bf16.gmra.mxu0 %v97
  %v172 = vpop.f32.mrf.mxu0
  %v173 = vadd.f32 %v64, %v172
  %v174 = vpop.f32.mrf.mxu0
  %v175 = vadd.f32 %v68, %v174
  %v176 = vpop.f32.mrf.mxu0
  %v177 = vadd.f32 %v64, %v176
  %v178 = vpop.f32.mrf.mxu0
  %v179 = vadd.f32 %v68, %v178
  %180 = vdwg.mxu0
  %v181 = vxor.u32 %v143, 2147483648
  %v182 = vmul.f32 %v181, 1.442695
  %v183 = vpow.pop %v182
  %v184 = vadd.f32 %v183, 1.0
  %v185 = vrcp.pop %v184
  %v186 = vmul.f32 1.0, %v185
  %v187 = vtanh.pop %v145
  %189 = vrot.lane.b32.xlu0 %v187, 96
  %v190 = vpop.permute.xlu0 %189
  %v192 = vmul.f32 %v186, %v190
  %v193 = vpack.c.bf16 %v192, %v192
  %195 = vrot.lane.b32.xlu0 %v193, 32
  %v196 = vpop.permute.xlu0 %195
  %v201 = vunpack.c.l.b16 %v32
  %v202 = vunpack.c.l.b16 %v33
  %v203 = vunpack.c.l.b16 %v34
  %v204 = vunpack.c.l.b16 %v35
  %v205 = vpack.c.b16 %v202, %v201
  %v206 = vpack.c.b16 %v204, %v203
  %vm209 = vcmask 261120
  %v211 = vsel %vm209, %v196, 0
  %213 = vmatprep.subr.bf16.mxu0 0
  %214 = vmatpush1.bf16.msra.mxu0 0
  %215 = vmatprep.subr.bf16.mxu0 0
  %216 = vmatpush1.bf16.msra.mxu0 0
  %217 = vmatprep.subr.bf16.mxu0 0
  %218 = vmatpush1.bf16.msra.mxu0 0
  %219 = vmatprep.subr.bf16.mxu0 0
  %220 = vmatpush1.bf16.msra.mxu0 0
  %221 = vmatprep.subr.bf16.mxu0 0
  %222 = vmatpush1.bf16.msra.mxu0 0
  %223 = vmatprep.subr.bf16.mxu0 0
  %224 = vmatpush1.bf16.msra.mxu0 0
  %225 = vmatprep.subr.bf16.mxu0 0
  %226 = vmatpush1.bf16.msra.mxu0 %v206
  %227 = vmatprep.subr.bf16.mxu0 0
  %228 = vmatpush1.bf16.msra.mxu0 %v205
  %229 = vmatprep.subr.bf16.mxu0 0
  %230 = vmatpush2.bf16.msra.mxu0 0
  %231 = vmatprep.subr.bf16.mxu0 0
  %232 = vmatpush2.bf16.msra.mxu0 0
  %233 = vmatprep.subr.bf16.mxu0 0
  %234 = vmatpush2.bf16.msra.mxu0 0
  %235 = vmatprep.subr.bf16.mxu0 0
  %236 = vmatpush2.bf16.msra.mxu0 0
  %237 = vmatprep.subr.bf16.mxu0 0
  %238 = vmatpush2.bf16.msra.mxu0 0
  %239 = vmatprep.subr.bf16.mxu0 0
  %240 = vmatpush2.bf16.msra.mxu0 0
  %241 = vmatprep.subr.bf16.mxu0 0
  %242 = vmatpush2.bf16.msra.mxu0 0
  %243 = vmatprep.subr.bf16.mxu0 0
  %244 = vmatpush2.bf16.msra.mxu0 0
  %245 = vmatprep.mubr.bf16.mxu0 0
  %246 = vmatmul.mubr.bf16.gmra.mxu0 %v211
  %v247 = vpop.f32.mrf.mxu0
  %v248 = vadd.f32 %v147, %v247
  %v249 = vpop.f32.mrf.mxu0
  %v250 = vpop.f32.mrf.mxu0
  %v251 = vpop.f32.mrf.mxu0
  %252 = vdwg.mxu0
  %v253 = vtanh.pop %v248
  %v254 = vxor.u32 %v248, 2147483648
  %v255 = vmul.f32 %v254, 1.442695
  %v256 = vpow.pop %v255
  %v257 = vadd.f32 %v256, 1.0
  %v258 = vrcp.pop %v257
  %v259 = vmul.f32 1.0, %v258
  %v260 = vpack.c.bf16 %v253, %v253
  %v265 = vunpack.c.l.b16 %v36
  %v266 = vunpack.c.l.b16 %v37
  %v267 = vunpack.c.l.b16 %v38
  %v268 = vunpack.c.l.b16 %v39
  %v269 = vpack.c.b16 %v266, %v265
  %v270 = vpack.c.b16 %v268, %v267
  %v274 = vsel %vm209, %v260, 0
  %276 = vmatprep.subr.bf16.mxu0 0
  %277 = vmatpush1.bf16.msra.mxu0 0
  %278 = vmatprep.subr.bf16.mxu0 0
  %279 = vmatpush1.bf16.msra.mxu0 0
  %280 = vmatprep.subr.bf16.mxu0 0
  %281 = vmatpush1.bf16.msra.mxu0 0
  %282 = vmatprep.subr.bf16.mxu0 0
  %283 = vmatpush1.bf16.msra.mxu0 0
  %284 = vmatprep.subr.bf16.mxu0 0
  %285 = vmatpush1.bf16.msra.mxu0 0
  %286 = vmatprep.subr.bf16.mxu0 0
  %287 = vmatpush1.bf16.msra.mxu0 0
  %288 = vmatprep.subr.bf16.mxu0 0
  %289 = vmatpush1.bf16.msra.mxu0 %v270
  %290 = vmatprep.subr.bf16.mxu0 0
  %291 = vmatpush1.bf16.msra.mxu0 %v269
  %292 = vmatprep.subr.bf16.mxu0 0
  %293 = vmatpush2.bf16.msra.mxu0 0
  %294 = vmatprep.subr.bf16.mxu0 0
  %295 = vmatpush2.bf16.msra.mxu0 0
  %296 = vmatprep.subr.bf16.mxu0 0
  %297 = vmatpush2.bf16.msra.mxu0 0
  %298 = vmatprep.subr.bf16.mxu0 0
  %299 = vmatpush2.bf16.msra.mxu0 0
  %300 = vmatprep.subr.bf16.mxu0 0
  %301 = vmatpush2.bf16.msra.mxu0 0
  %302 = vmatprep.subr.bf16.mxu0 0
  %303 = vmatpush2.bf16.msra.mxu0 0
  %304 = vmatprep.subr.bf16.mxu0 0
  %305 = vmatpush2.bf16.msra.mxu0 0
  %306 = vmatprep.subr.bf16.mxu0 0
  %307 = vmatpush2.bf16.msra.mxu0 0
  %308 = vmatprep.mubr.bf16.mxu0 0
  %309 = vmatmul.mubr.bf16.gmra.mxu0 %v274
  %v310 = vpop.f32.mrf.mxu0
  %v311 = vadd.f32 0.0, %v310
  %v312 = vpop.f32.mrf.mxu0
  %v313 = vpop.f32.mrf.mxu0
  %v314 = vpop.f32.mrf.mxu0
  %315 = vdwg.mxu0
  %317 = vrot.lane.b32.xlu0 %v311, 32
  %v318 = vpop.permute.xlu0 %317
  %v320 = vadd.f32 %v248, %v318
  %v321 = vxor.u32 %v320, 2147483648
  %v322 = vmul.f32 %v321, 1.442695
  %v323 = vpow.pop %v322
  %v324 = vadd.f32 %v323, 1.0
  %v325 = vrcp.pop %v324
  %v326 = vmul.f32 1.0, %v325
  %328 = vrot.lane.b32.xlu0 %v192, 96
  %v329 = vpop.permute.xlu0 %328
  %v331 = vmul.f32 %v259, %v329
  %v332 = vpack.c.bf16 %v331, %v331
  %334 = vrot.lane.b32.xlu0 %v332, 64
  %v335 = vpop.permute.xlu0 %334
  %v340 = vunpack.c.l.b16 %v40
  %v341 = vunpack.c.l.b16 %v41
  %v342 = vunpack.c.l.b16 %v42
  %v343 = vunpack.c.l.b16 %v43
  %v344 = vpack.c.b16 %v341, %v340
  %v345 = vpack.c.b16 %v343, %v342
  %v349 = vsel %vm209, %v335, 0
  %351 = vmatprep.subr.bf16.mxu0 0
  %352 = vmatpush1.bf16.msra.mxu0 0
  %353 = vmatprep.subr.bf16.mxu0 0
  %354 = vmatpush1.bf16.msra.mxu0 0
  %355 = vmatprep.subr.bf16.mxu0 0
  %356 = vmatpush1.bf16.msra.mxu0 0
  %357 = vmatprep.subr.bf16.mxu0 0
  %358 = vmatpush1.bf16.msra.mxu0 0
  %359 = vmatprep.subr.bf16.mxu0 0
  %360 = vmatpush1.bf16.msra.mxu0 0
  %361 = vmatprep.subr.bf16.mxu0 0
  %362 = vmatpush1.bf16.msra.mxu0 0
  %363 = vmatprep.subr.bf16.mxu0 0
  %364 = vmatpush1.bf16.msra.mxu0 %v345
  %365 = vmatprep.subr.bf16.mxu0 0
  %366 = vmatpush1.bf16.msra.mxu0 %v344
  %367 = vmatprep.subr.bf16.mxu0 0
  %368 = vmatpush2.bf16.msra.mxu0 0
  %369 = vmatprep.subr.bf16.mxu0 0
  %370 = vmatpush2.bf16.msra.mxu0 0
  %371 = vmatprep.subr.bf16.mxu0 0
  %372 = vmatpush2.bf16.msra.mxu0 0
  %373 = vmatprep.subr.bf16.mxu0 0
  %374 = vmatpush2.bf16.msra.mxu0 0
  %375 = vmatprep.subr.bf16.mxu0 0
  %376 = vmatpush2.bf16.msra.mxu0 0
  %377 = vmatprep.subr.bf16.mxu0 0
  %378 = vmatpush2.bf16.msra.mxu0 0
  %379 = vmatprep.subr.bf16.mxu0 0
  %380 = vmatpush2.bf16.msra.mxu0 0
  %381 = vmatprep.subr.bf16.mxu0 0
  %382 = vmatpush2.bf16.msra.mxu0 0
  %383 = vmatprep.mubr.bf16.mxu0 0
  %384 = vmatmul.mubr.bf16.gmra.mxu0 %v349
  %v385 = vpop.f32.mrf.mxu0
  %v386 = vadd.f32 %v149, %v385
  %v387 = vpop.f32.mrf.mxu0
  %v388 = vpop.f32.mrf.mxu0
  %v389 = vpop.f32.mrf.mxu0
  %390 = vdwg.mxu0
  %v391 = vtanh.pop %v386
  %v392 = vsub.f32 1.0, %v259
  %393 = vrot.lane.b32.xlu0 %v192, 64
  %v394 = vpop.permute.xlu0 %393
  %v396 = vmul.f32 %v326, %v394
  %398 = vrot.lane.b32.xlu0 %v396, 64
  %v399 = vpop.permute.xlu0 %398
  %v401 = vmul.f32 %v392, %v399
  %403 = vrot.lane.b32.xlu0 %v391, 96
  %v404 = vpop.permute.xlu0 %403
  %v406 = vmul.f32 %v259, %v404
  %v407 = vadd.f32 %v401, %v406
  %v408 = vpack.c.bf16 %v407, %v407
  %410 = vrot.lane.b32.xlu0 %v408, 32
  %v411 = vpop.permute.xlu0 %410
  %v413 = vsel %vm209, %v411, 0
  %415 = vmatprep.subr.bf16.mxu0 0
  %416 = vmatpush1.bf16.msra.mxu0 0
  %417 = vmatprep.subr.bf16.mxu0 0
  %418 = vmatpush1.bf16.msra.mxu0 0
  %419 = vmatprep.subr.bf16.mxu0 0
  %420 = vmatpush1.bf16.msra.mxu0 0
  %421 = vmatprep.subr.bf16.mxu0 0
  %422 = vmatpush1.bf16.msra.mxu0 0
  %423 = vmatprep.subr.bf16.mxu0 0
  %424 = vmatpush1.bf16.msra.mxu0 0
  %425 = vmatprep.subr.bf16.mxu0 0
  %426 = vmatpush1.bf16.msra.mxu0 0
  %427 = vmatprep.subr.bf16.mxu0 0
  %428 = vmatpush1.bf16.msra.mxu0 %v206
  %429 = vmatprep.subr.bf16.mxu0 0
  %430 = vmatpush1.bf16.msra.mxu0 %v205
  %431 = vmatprep.subr.bf16.mxu0 0
  %432 = vmatpush2.bf16.msra.mxu0 0
  %433 = vmatprep.subr.bf16.mxu0 0
  %434 = vmatpush2.bf16.msra.mxu0 0
  %435 = vmatprep.subr.bf16.mxu0 0
  %436 = vmatpush2.bf16.msra.mxu0 0
  %437 = vmatprep.subr.bf16.mxu0 0
  %438 = vmatpush2.bf16.msra.mxu0 0
  %439 = vmatprep.subr.bf16.mxu0 0
  %440 = vmatpush2.bf16.msra.mxu0 0
  %441 = vmatprep.subr.bf16.mxu0 0
  %442 = vmatpush2.bf16.msra.mxu0 0
  %443 = vmatprep.subr.bf16.mxu0 0
  %444 = vmatpush2.bf16.msra.mxu0 0
  %445 = vmatprep.subr.bf16.mxu0 0
  %446 = vmatpush2.bf16.msra.mxu0 0
  %447 = vmatprep.mubr.bf16.mxu0 0
  %448 = vmatmul.mubr.bf16.gmra.mxu0 %v413
  %v449 = vpop.f32.mrf.mxu0
  %v450 = vadd.f32 %v153, %v449
  %v451 = vpop.f32.mrf.mxu0
  %v452 = vpop.f32.mrf.mxu0
  %v453 = vpop.f32.mrf.mxu0
  %454 = vdwg.mxu0
  %v455 = vtanh.pop %v450
  %v456 = vxor.u32 %v450, 2147483648
  %v457 = vmul.f32 %v456, 1.442695
  %v458 = vpow.pop %v457
  %v459 = vadd.f32 %v458, 1.0
  %v460 = vrcp.pop %v459
  %v461 = vmul.f32 1.0, %v460
  %v462 = vpack.c.bf16 %v455, %v455
  %v464 = vsel %vm209, %v462, 0
  %466 = vmatprep.subr.bf16.mxu0 0
  %467 = vmatpush1.bf16.msra.mxu0 0
  %468 = vmatprep.subr.bf16.mxu0 0
  %469 = vmatpush1.bf16.msra.mxu0 0
  %470 = vmatprep.subr.bf16.mxu0 0
  %471 = vmatpush1.bf16.msra.mxu0 0
  %472 = vmatprep.subr.bf16.mxu0 0
  %473 = vmatpush1.bf16.msra.mxu0 0
  %474 = vmatprep.subr.bf16.mxu0 0
  %475 = vmatpush1.bf16.msra.mxu0 0
  %476 = vmatprep.subr.bf16.mxu0 0
  %477 = vmatpush1.bf16.msra.mxu0 0
  %478 = vmatprep.subr.bf16.mxu0 0
  %479 = vmatpush1.bf16.msra.mxu0 %v270
  %480 = vmatprep.subr.bf16.mxu0 0
  %481 = vmatpush1.bf16.msra.mxu0 %v269
  %482 = vmatprep.subr.bf16.mxu0 0
  %483 = vmatpush2.bf16.msra.mxu0 0
  %484 = vmatprep.subr.bf16.mxu0 0
  %485 = vmatpush2.bf16.msra.mxu0 0
  %486 = vmatprep.subr.bf16.mxu0 0
  %487 = vmatpush2.bf16.msra.mxu0 0
  %488 = vmatprep.subr.bf16.mxu0 0
  %489 = vmatpush2.bf16.msra.mxu0 0
  %490 = vmatprep.subr.bf16.mxu0 0
  %491 = vmatpush2.bf16.msra.mxu0 0
  %492 = vmatprep.subr.bf16.mxu0 0
  %493 = vmatpush2.bf16.msra.mxu0 0
  %494 = vmatprep.subr.bf16.mxu0 0
  %495 = vmatpush2.bf16.msra.mxu0 0
  %496 = vmatprep.subr.bf16.mxu0 0
  %497 = vmatpush2.bf16.msra.mxu0 0
  %498 = vmatprep.mubr.bf16.mxu0 0
  %499 = vmatmul.mubr.bf16.gmra.mxu0 %v464
  %v500 = vpop.f32.mrf.mxu0
  %v501 = vadd.f32 0.0, %v500
  %v502 = vpop.f32.mrf.mxu0
  %v503 = vpop.f32.mrf.mxu0
  %v504 = vpop.f32.mrf.mxu0
  %505 = vdwg.mxu0
  %507 = vrot.lane.b32.xlu0 %v501, 32
  %v508 = vpop.permute.xlu0 %507
  %v510 = vadd.f32 %v450, %v508
  %v511 = vxor.u32 %v510, 2147483648
  %v512 = vmul.f32 %v511, 1.442695
  %v513 = vpow.pop %v512
  %v514 = vadd.f32 %v513, 1.0
  %v515 = vrcp.pop %v514
  %v516 = vmul.f32 1.0, %v515
  %518 = vrot.lane.b32.xlu0 %v407, 96
  %v519 = vpop.permute.xlu0 %518
  %v521 = vmul.f32 %v461, %v519
  %v522 = vpack.c.bf16 %v521, %v521
  %524 = vrot.lane.b32.xlu0 %v522, 64
  %v525 = vpop.permute.xlu0 %524
  %v527 = vsel %vm209, %v525, 0
  %529 = vmatprep.subr.bf16.mxu0 0
  %530 = vmatpush1.bf16.msra.mxu0 0
  %531 = vmatprep.subr.bf16.mxu0 0
  %532 = vmatpush1.bf16.msra.mxu0 0
  %533 = vmatprep.subr.bf16.mxu0 0
  %534 = vmatpush1.bf16.msra.mxu0 0
  %535 = vmatprep.subr.bf16.mxu0 0
  %536 = vmatpush1.bf16.msra.mxu0 0
  %537 = vmatprep.subr.bf16.mxu0 0
  %538 = vmatpush1.bf16.msra.mxu0 0
  %539 = vmatprep.subr.bf16.mxu0 0
  %540 = vmatpush1.bf16.msra.mxu0 0
  %541 = vmatprep.subr.bf16.mxu0 0
  %542 = vmatpush1.bf16.msra.mxu0 %v345
  %543 = vmatprep.subr.bf16.mxu0 0
  %544 = vmatpush1.bf16.msra.mxu0 %v344
  %545 = vmatprep.subr.bf16.mxu0 0
  %546 = vmatpush2.bf16.msra.mxu0 0
  %547 = vmatprep.subr.bf16.mxu0 0
  %548 = vmatpush2.bf16.msra.mxu0 0
  %549 = vmatprep.subr.bf16.mxu0 0
  %550 = vmatpush2.bf16.msra.mxu0 0
  %551 = vmatprep.subr.bf16.mxu0 0
  %552 = vmatpush2.bf16.msra.mxu0 0
  %553 = vmatprep.subr.bf16.mxu0 0
  %554 = vmatpush2.bf16.msra.mxu0 0
  %555 = vmatprep.subr.bf16.mxu0 0
  %556 = vmatpush2.bf16.msra.mxu0 0
  %557 = vmatprep.subr.bf16.mxu0 0
  %558 = vmatpush2.bf16.msra.mxu0 0
  %559 = vmatprep.subr.bf16.mxu0 0
  %560 = vmatpush2.bf16.msra.mxu0 0
  %561 = vmatprep.mubr.bf16.mxu0 0
  %562 = vmatmul.mubr.bf16.gmra.mxu0 %v527
  %v563 = vpop.f32.mrf.mxu0
  %v564 = vadd.f32 %v155, %v563
  %v565 = vpop.f32.mrf.mxu0
  %v566 = vpop.f32.mrf.mxu0
  %v567 = vpop.f32.mrf.mxu0
  %568 = vdwg.mxu0
  %v569 = vtanh.pop %v564
  %v570 = vsub.f32 1.0, %v461
  %571 = vrot.lane.b32.xlu0 %v407, 64
  %v572 = vpop.permute.xlu0 %571
  %v574 = vmul.f32 %v516, %v572
  %576 = vrot.lane.b32.xlu0 %v574, 64
  %v577 = vpop.permute.xlu0 %576
  %v579 = vmul.f32 %v570, %v577
  %581 = vrot.lane.b32.xlu0 %v569, 96
  %v582 = vpop.permute.xlu0 %581
  %v584 = vmul.f32 %v461, %v582
  %v585 = vadd.f32 %v579, %v584
  %v586 = vpack.c.bf16 %v585, %v585
  %588 = vrot.lane.b32.xlu0 %v586, 32
  %v589 = vpop.permute.xlu0 %588
  %v591 = vsel %vm209, %v589, 0
  %593 = vmatprep.subr.bf16.mxu0 0
  %594 = vmatpush1.bf16.msra.mxu0 0
  %595 = vmatprep.subr.bf16.mxu0 0
  %596 = vmatpush1.bf16.msra.mxu0 0
  %597 = vmatprep.subr.bf16.mxu0 0
  %598 = vmatpush1.bf16.msra.mxu0 0
  %599 = vmatprep.subr.bf16.mxu0 0
  %600 = vmatpush1.bf16.msra.mxu0 0
  %601 = vmatprep.subr.bf16.mxu0 0
  %602 = vmatpush1.bf16.msra.mxu0 0
  %603 = vmatprep.subr.bf16.mxu0 0
  %604 = vmatpush1.bf16.msra.mxu0 0
  %605 = vmatprep.subr.bf16.mxu0 0
  %606 = vmatpush1.bf16.msra.mxu0 %v206
  %607 = vmatprep.subr.bf16.mxu0 0
  %608 = vmatpush1.bf16.msra.mxu0 %v205
  %609 = vmatprep.subr.bf16.mxu0 0
  %610 = vmatpush2.bf16.msra.mxu0 0
  %611 = vmatprep.subr.bf16.mxu0 0
  %612 = vmatpush2.bf16.msra.mxu0 0
  %613 = vmatprep.subr.bf16.mxu0 0
  %614 = vmatpush2.bf16.msra.mxu0 0
  %615 = vmatprep.subr.bf16.mxu0 0
  %616 = vmatpush2.bf16.msra.mxu0 0
  %617 = vmatprep.subr.bf16.mxu0 0
  %618 = vmatpush2.bf16.msra.mxu0 0
  %619 = vmatprep.subr.bf16.mxu0 0
  %620 = vmatpush2.bf16.msra.mxu0 0
  %621 = vmatprep.subr.bf16.mxu0 0
  %622 = vmatpush2.bf16.msra.mxu0 0
  %623 = vmatprep.subr.bf16.mxu0 0
  %624 = vmatpush2.bf16.msra.mxu0 0
  %625 = vmatprep.mubr.bf16.mxu0 0
  %626 = vmatmul.mubr.bf16.gmra.mxu0 %v591
  %v627 = vpop.f32.mrf.mxu0
  %v628 = vadd.f32 %v157, %v627
  %v629 = vpop.f32.mrf.mxu0
  %v630 = vpop.f32.mrf.mxu0
  %v631 = vpop.f32.mrf.mxu0
  %632 = vdwg.mxu0
  %v633 = vtanh.pop %v628
  %v634 = vxor.u32 %v628, 2147483648
  %v635 = vmul.f32 %v634, 1.442695
  %v636 = vpow.pop %v635
  %v637 = vadd.f32 %v636, 1.0
  %v638 = vrcp.pop %v637
  %v639 = vmul.f32 1.0, %v638
  %v640 = vpack.c.bf16 %v633, %v633
  %v642 = vsel %vm209, %v640, 0
  %644 = vmatprep.subr.bf16.mxu0 0
  %645 = vmatpush1.bf16.msra.mxu0 0
  %646 = vmatprep.subr.bf16.mxu0 0
  %647 = vmatpush1.bf16.msra.mxu0 0
  %648 = vmatprep.subr.bf16.mxu0 0
  %649 = vmatpush1.bf16.msra.mxu0 0
  %650 = vmatprep.subr.bf16.mxu0 0
  %651 = vmatpush1.bf16.msra.mxu0 0
  %652 = vmatprep.subr.bf16.mxu0 0
  %653 = vmatpush1.bf16.msra.mxu0 0
  %654 = vmatprep.subr.bf16.mxu0 0
  %655 = vmatpush1.bf16.msra.mxu0 0
  %656 = vmatprep.subr.bf16.mxu0 0
  %657 = vmatpush1.bf16.msra.mxu0 %v270
  %658 = vmatprep.subr.bf16.mxu0 0
  %659 = vmatpush1.bf16.msra.mxu0 %v269
  %660 = vmatprep.subr.bf16.mxu0 0
  %661 = vmatpush2.bf16.msra.mxu0 0
  %662 = vmatprep.subr.bf16.mxu0 0
  %663 = vmatpush2.bf16.msra.mxu0 0
  %664 = vmatprep.subr.bf16.mxu0 0
  %665 = vmatpush2.bf16.msra.mxu0 0
  %666 = vmatprep.subr.bf16.mxu0 0
  %667 = vmatpush2.bf16.msra.mxu0 0
  %668 = vmatprep.subr.bf16.mxu0 0
  %669 = vmatpush2.bf16.msra.mxu0 0
  %670 = vmatprep.subr.bf16.mxu0 0
  %671 = vmatpush2.bf16.msra.mxu0 0
  %672 = vmatprep.subr.bf16.mxu0 0
  %673 = vmatpush2.bf16.msra.mxu0 0
  %674 = vmatprep.subr.bf16.mxu0 0
  %675 = vmatpush2.bf16.msra.mxu0 0
  %676 = vmatprep.mubr.bf16.mxu0 0
  %677 = vmatmul.mubr.bf16.gmra.mxu0 %v642
  %v678 = vpop.f32.mrf.mxu0
  %v679 = vadd.f32 0.0, %v678
  %v680 = vpop.f32.mrf.mxu0
  %v681 = vpop.f32.mrf.mxu0
  %v682 = vpop.f32.mrf.mxu0
  %683 = vdwg.mxu0
  %685 = vrot.lane.b32.xlu0 %v679, 32
  %v686 = vpop.permute.xlu0 %685
  %v688 = vadd.f32 %v628, %v686
  %v689 = vxor.u32 %v688, 2147483648
  %v690 = vmul.f32 %v689, 1.442695
  %v691 = vpow.pop %v690
  %v692 = vadd.f32 %v691, 1.0
  %v693 = vrcp.pop %v692
  %v694 = vmul.f32 1.0, %v693
  %696 = vrot.lane.b32.xlu0 %v585, 96
  %v697 = vpop.permute.xlu0 %696
  %v699 = vmul.f32 %v639, %v697
  %v700 = vpack.c.bf16 %v699, %v699
  %702 = vrot.lane.b32.xlu0 %v700, 64
  %v703 = vpop.permute.xlu0 %702
  %v705 = vsel %vm209, %v703, 0
  %707 = vmatprep.subr.bf16.mxu0 0
  %708 = vmatpush1.bf16.msra.mxu0 0
  %709 = vmatprep.subr.bf16.mxu0 0
  %710 = vmatpush1.bf16.msra.mxu0 0
  %711 = vmatprep.subr.bf16.mxu0 0
  %712 = vmatpush1.bf16.msra.mxu0 0
  %713 = vmatprep.subr.bf16.mxu0 0
  %714 = vmatpush1.bf16.msra.mxu0 0
  %715 = vmatprep.subr.bf16.mxu0 0
  %716 = vmatpush1.bf16.msra.mxu0 0
  %717 = vmatprep.subr.bf16.mxu0 0
  %718 = vmatpush1.bf16.msra.mxu0 0
  %719 = vmatprep.subr.bf16.mxu0 0
  %720 = vmatpush1.bf16.msra.mxu0 %v345
  %721 = vmatprep.subr.bf16.mxu0 0
  %722 = vmatpush1.bf16.msra.mxu0 %v344
  %723 = vmatprep.subr.bf16.mxu0 0
  %724 = vmatpush2.bf16.msra.mxu0 0
  %725 = vmatprep.subr.bf16.mxu0 0
  %726 = vmatpush2.bf16.msra.mxu0 0
  %727 = vmatprep.subr.bf16.mxu0 0
  %728 = vmatpush2.bf16.msra.mxu0 0
  %729 = vmatprep.subr.bf16.mxu0 0
  %730 = vmatpush2.bf16.msra.mxu0 0
  %731 = vmatprep.subr.bf16.mxu0 0
  %732 = vmatpush2.bf16.msra.mxu0 0
  %733 = vmatprep.subr.bf16.mxu0 0
  %734 = vmatpush2.bf16.msra.mxu0 0
  %735 = vmatprep.subr.bf16.mxu0 0
  %736 = vmatpush2.bf16.msra.mxu0 0
  %737 = vmatprep.subr.bf16.mxu0 0
  %738 = vmatpush2.bf16.msra.mxu0 0
  %739 = vmatprep.mubr.bf16.mxu0 0
  %740 = vmatmul.mubr.bf16.gmra.mxu0 %v705
  %v741 = vpop.f32.mrf.mxu0
  %v742 = vadd.f32 %v159, %v741
  %v743 = vpop.f32.mrf.mxu0
  %v744 = vpop.f32.mrf.mxu0
  %v745 = vpop.f32.mrf.mxu0
  %746 = vdwg.mxu0
  %v747 = vtanh.pop %v742
  %v748 = vsub.f32 1.0, %v639
  %749 = vrot.lane.b32.xlu0 %v585, 64
  %v750 = vpop.permute.xlu0 %749
  %v752 = vmul.f32 %v694, %v750
  %754 = vrot.lane.b32.xlu0 %v752, 64
  %v755 = vpop.permute.xlu0 %754
  %v757 = vmul.f32 %v748, %v755
  %759 = vrot.lane.b32.xlu0 %v747, 96
  %v760 = vpop.permute.xlu0 %759
  %v762 = vmul.f32 %v639, %v760
  %v763 = vadd.f32 %v757, %v762
  %v764 = vpack.c.bf16 %v763, %v763
  %766 = vrot.lane.b32.xlu0 %v764, 32
  %v767 = vpop.permute.xlu0 %766
  %v769 = vsel %vm209, %v767, 0
  %771 = vmatprep.subr.bf16.mxu0 0
  %772 = vmatpush1.bf16.msra.mxu0 0
  %773 = vmatprep.subr.bf16.mxu0 0
  %774 = vmatpush1.bf16.msra.mxu0 0
  %775 = vmatprep.subr.bf16.mxu0 0
  %776 = vmatpush1.bf16.msra.mxu0 0
  %777 = vmatprep.subr.bf16.mxu0 0
  %778 = vmatpush1.bf16.msra.mxu0 0
  %779 = vmatprep.subr.bf16.mxu0 0
  %780 = vmatpush1.bf16.msra.mxu0 0
  %781 = vmatprep.subr.bf16.mxu0 0
  %782 = vmatpush1.bf16.msra.mxu0 0
  %783 = vmatprep.subr.bf16.mxu0 0
  %784 = vmatpush1.bf16.msra.mxu0 %v206
  %785 = vmatprep.subr.bf16.mxu0 0
  %786 = vmatpush1.bf16.msra.mxu0 %v205
  %787 = vmatprep.subr.bf16.mxu0 0
  %788 = vmatpush2.bf16.msra.mxu0 0
  %789 = vmatprep.subr.bf16.mxu0 0
  %790 = vmatpush2.bf16.msra.mxu0 0
  %791 = vmatprep.subr.bf16.mxu0 0
  %792 = vmatpush2.bf16.msra.mxu0 0
  %793 = vmatprep.subr.bf16.mxu0 0
  %794 = vmatpush2.bf16.msra.mxu0 0
  %795 = vmatprep.subr.bf16.mxu0 0
  %796 = vmatpush2.bf16.msra.mxu0 0
  %797 = vmatprep.subr.bf16.mxu0 0
  %798 = vmatpush2.bf16.msra.mxu0 0
  %799 = vmatprep.subr.bf16.mxu0 0
  %800 = vmatpush2.bf16.msra.mxu0 0
  %801 = vmatprep.subr.bf16.mxu0 0
  %802 = vmatpush2.bf16.msra.mxu0 0
  %803 = vmatprep.mubr.bf16.mxu0 0
  %804 = vmatmul.mubr.bf16.gmra.mxu0 %v769
  %v805 = vpop.f32.mrf.mxu0
  %v806 = vadd.f32 %v163, %v805
  %v807 = vpop.f32.mrf.mxu0
  %v808 = vpop.f32.mrf.mxu0
  %v809 = vpop.f32.mrf.mxu0
  %810 = vdwg.mxu0
  %v811 = vtanh.pop %v806
  %v812 = vxor.u32 %v806, 2147483648
  %v813 = vmul.f32 %v812, 1.442695
  %v814 = vpow.pop %v813
  %v815 = vadd.f32 %v814, 1.0
  %v816 = vrcp.pop %v815
  %v817 = vmul.f32 1.0, %v816
  %v818 = vpack.c.bf16 %v811, %v811
  %v820 = vsel %vm209, %v818, 0
  %822 = vmatprep.subr.bf16.mxu0 0
  %823 = vmatpush1.bf16.msra.mxu0 0
  %824 = vmatprep.subr.bf16.mxu0 0
  %825 = vmatpush1.bf16.msra.mxu0 0
  %826 = vmatprep.subr.bf16.mxu0 0
  %827 = vmatpush1.bf16.msra.mxu0 0
  %828 = vmatprep.subr.bf16.mxu0 0
  %829 = vmatpush1.bf16.msra.mxu0 0
  %830 = vmatprep.subr.bf16.mxu0 0
  %831 = vmatpush1.bf16.msra.mxu0 0
  %832 = vmatprep.subr.bf16.mxu0 0
  %833 = vmatpush1.bf16.msra.mxu0 0
  %834 = vmatprep.subr.bf16.mxu0 0
  %835 = vmatpush1.bf16.msra.mxu0 %v270
  %836 = vmatprep.subr.bf16.mxu0 0
  %837 = vmatpush1.bf16.msra.mxu0 %v269
  %838 = vmatprep.subr.bf16.mxu0 0
  %839 = vmatpush2.bf16.msra.mxu0 0
  %840 = vmatprep.subr.bf16.mxu0 0
  %841 = vmatpush2.bf16.msra.mxu0 0
  %842 = vmatprep.subr.bf16.mxu0 0
  %843 = vmatpush2.bf16.msra.mxu0 0
  %844 = vmatprep.subr.bf16.mxu0 0
  %845 = vmatpush2.bf16.msra.mxu0 0
  %846 = vmatprep.subr.bf16.mxu0 0
  %847 = vmatpush2.bf16.msra.mxu0 0
  %848 = vmatprep.subr.bf16.mxu0 0
  %849 = vmatpush2.bf16.msra.mxu0 0
  %850 = vmatprep.subr.bf16.mxu0 0
  %851 = vmatpush2.bf16.msra.mxu0 0
  %852 = vmatprep.subr.bf16.mxu0 0
  %853 = vmatpush2.bf16.msra.mxu0 0
  %854 = vmatprep.mubr.bf16.mxu0 0
  %855 = vmatmul.mubr.bf16.gmra.mxu0 %v820
  %v856 = vpop.f32.mrf.mxu0
  %v857 = vadd.f32 0.0, %v856
  %v858 = vpop.f32.mrf.mxu0
  %v859 = vpop.f32.mrf.mxu0
  %v860 = vpop.f32.mrf.mxu0
  %861 = vdwg.mxu0
  %863 = vrot.lane.b32.xlu0 %v857, 32
  %v864 = vpop.permute.xlu0 %863
  %v866 = vadd.f32 %v806, %v864
  %v867 = vxor.u32 %v866, 2147483648
  %v868 = vmul.f32 %v867, 1.442695
  %v869 = vpow.pop %v868
  %v870 = vadd.f32 %v869, 1.0
  %v871 = vrcp.pop %v870
  %v872 = vmul.f32 1.0, %v871
  %874 = vrot.lane.b32.xlu0 %v763, 96
  %v875 = vpop.permute.xlu0 %874
  %v877 = vmul.f32 %v817, %v875
  %v878 = vpack.c.bf16 %v877, %v877
  %880 = vrot.lane.b32.xlu0 %v878, 64
  %v881 = vpop.permute.xlu0 %880
  %v883 = vsel %vm209, %v881, 0
  %885 = vmatprep.subr.bf16.mxu0 0
  %886 = vmatpush1.bf16.msra.mxu0 0
  %887 = vmatprep.subr.bf16.mxu0 0
  %888 = vmatpush1.bf16.msra.mxu0 0
  %889 = vmatprep.subr.bf16.mxu0 0
  %890 = vmatpush1.bf16.msra.mxu0 0
  %891 = vmatprep.subr.bf16.mxu0 0
  %892 = vmatpush1.bf16.msra.mxu0 0
  %893 = vmatprep.subr.bf16.mxu0 0
  %894 = vmatpush1.bf16.msra.mxu0 0
  %895 = vmatprep.subr.bf16.mxu0 0
  %896 = vmatpush1.bf16.msra.mxu0 0
  %897 = vmatprep.subr.bf16.mxu0 0
  %898 = vmatpush1.bf16.msra.mxu0 %v345
  %899 = vmatprep.subr.bf16.mxu0 0
  %900 = vmatpush1.bf16.msra.mxu0 %v344
  %901 = vmatprep.subr.bf16.mxu0 0
  %902 = vmatpush2.bf16.msra.mxu0 0
  %903 = vmatprep.subr.bf16.mxu0 0
  %904 = vmatpush2.bf16.msra.mxu0 0
  %905 = vmatprep.subr.bf16.mxu0 0
  %906 = vmatpush2.bf16.msra.mxu0 0
  %907 = vmatprep.subr.bf16.mxu0 0
  %908 = vmatpush2.bf16.msra.mxu0 0
  %909 = vmatprep.subr.bf16.mxu0 0
  %910 = vmatpush2.bf16.msra.mxu0 0
  %911 = vmatprep.subr.bf16.mxu0 0
  %912 = vmatpush2.bf16.msra.mxu0 0
  %913 = vmatprep.subr.bf16.mxu0 0
  %914 = vmatpush2.bf16.msra.mxu0 0
  %915 = vmatprep.subr.bf16.mxu0 0
  %916 = vmatpush2.bf16.msra.mxu0 0
  %917 = vmatprep.mubr.bf16.mxu0 0
  %918 = vmatmul.mubr.bf16.gmra.mxu0 %v883
  %v919 = vpop.f32.mrf.mxu0
  %v920 = vadd.f32 %v165, %v919
  %v921 = vpop.f32.mrf.mxu0
  %v922 = vpop.f32.mrf.mxu0
  %v923 = vpop.f32.mrf.mxu0
  %924 = vdwg.mxu0
  %v925 = vtanh.pop %v920
  %v926 = vsub.f32 1.0, %v817
  %927 = vrot.lane.b32.xlu0 %v763, 64
  %v928 = vpop.permute.xlu0 %927
  %v930 = vmul.f32 %v872, %v928
  %932 = vrot.lane.b32.xlu0 %v930, 64
  %v933 = vpop.permute.xlu0 %932
  %v935 = vmul.f32 %v926, %v933
  %937 = vrot.lane.b32.xlu0 %v925, 96
  %v938 = vpop.permute.xlu0 %937
  %v940 = vmul.f32 %v817, %v938
  %v941 = vadd.f32 %v935, %v940
  %v942 = vpack.c.bf16 %v941, %v941
  %944 = vrot.lane.b32.xlu0 %v942, 32
  %v945 = vpop.permute.xlu0 %944
  %v947 = vsel %vm209, %v945, 0
  %949 = vmatprep.subr.bf16.mxu0 0
  %950 = vmatpush1.bf16.msra.mxu0 0
  %951 = vmatprep.subr.bf16.mxu0 0
  %952 = vmatpush1.bf16.msra.mxu0 0
  %953 = vmatprep.subr.bf16.mxu0 0
  %954 = vmatpush1.bf16.msra.mxu0 0
  %955 = vmatprep.subr.bf16.mxu0 0
  %956 = vmatpush1.bf16.msra.mxu0 0
  %957 = vmatprep.subr.bf16.mxu0 0
  %958 = vmatpush1.bf16.msra.mxu0 0
  %959 = vmatprep.subr.bf16.mxu0 0
  %960 = vmatpush1.bf16.msra.mxu0 0
  %961 = vmatprep.subr.bf16.mxu0 0
  %962 = vmatpush1.bf16.msra.mxu0 %v206
  %963 = vmatprep.subr.bf16.mxu0 0
  %964 = vmatpush1.bf16.msra.mxu0 %v205
  %965 = vmatprep.subr.bf16.mxu0 0
  %966 = vmatpush2.bf16.msra.mxu0 0
  %967 = vmatprep.subr.bf16.mxu0 0
  %968 = vmatpush2.bf16.msra.mxu0 0
  %969 = vmatprep.subr.bf16.mxu0 0
  %970 = vmatpush2.bf16.msra.mxu0 0
  %971 = vmatprep.subr.bf16.mxu0 0
  %972 = vmatpush2.bf16.msra.mxu0 0
  %973 = vmatprep.subr.bf16.mxu0 0
  %974 = vmatpush2.bf16.msra.mxu0 0
  %975 = vmatprep.subr.bf16.mxu0 0
  %976 = vmatpush2.bf16.msra.mxu0 0
  %977 = vmatprep.subr.bf16.mxu0 0
  %978 = vmatpush2.bf16.msra.mxu0 0
  %979 = vmatprep.subr.bf16.mxu0 0
  %980 = vmatpush2.bf16.msra.mxu0 0
  %981 = vmatprep.mubr.bf16.mxu0 0
  %982 = vmatmul.mubr.bf16.gmra.mxu0 %v947
  %v983 = vpop.f32.mrf.mxu0
  %v984 = vadd.f32 %v167, %v983
  %v985 = vpop.f32.mrf.mxu0
  %v986 = vpop.f32.mrf.mxu0
  %v987 = vpop.f32.mrf.mxu0
  %988 = vdwg.mxu0
  %v989 = vtanh.pop %v984
  %v990 = vxor.u32 %v984, 2147483648
  %v991 = vmul.f32 %v990, 1.442695
  %v992 = vpow.pop %v991
  %v993 = vadd.f32 %v992, 1.0
  %v994 = vrcp.pop %v993
  %v995 = vmul.f32 1.0, %v994
  %v996 = vpack.c.bf16 %v989, %v989
  %v998 = vsel %vm209, %v996, 0
  %1000 = vmatprep.subr.bf16.mxu0 0
  %1001 = vmatpush1.bf16.msra.mxu0 0
  %1002 = vmatprep.subr.bf16.mxu0 0
  %1003 = vmatpush1.bf16.msra.mxu0 0
  %1004 = vmatprep.subr.bf16.mxu0 0
  %1005 = vmatpush1.bf16.msra.mxu0 0
  %1006 = vmatprep.subr.bf16.mxu0 0
  %1007 = vmatpush1.bf16.msra.mxu0 0
  %1008 = vmatprep.subr.bf16.mxu0 0
  %1009 = vmatpush1.bf16.msra.mxu0 0
  %1010 = vmatprep.subr.bf16.mxu0 0
  %1011 = vmatpush1.bf16.msra.mxu0 0
  %1012 = vmatprep.subr.bf16.mxu0 0
  %1013 = vmatpush1.bf16.msra.mxu0 %v270
  %1014 = vmatprep.subr.bf16.mxu0 0
  %1015 = vmatpush1.bf16.msra.mxu0 %v269
  %1016 = vmatprep.subr.bf16.mxu0 0
  %1017 = vmatpush2.bf16.msra.mxu0 0
  %1018 = vmatprep.subr.bf16.mxu0 0
  %1019 = vmatpush2.bf16.msra.mxu0 0
  %1020 = vmatprep.subr.bf16.mxu0 0
  %1021 = vmatpush2.bf16.msra.mxu0 0
  %1022 = vmatprep.subr.bf16.mxu0 0
  %1023 = vmatpush2.bf16.msra.mxu0 0
  %1024 = vmatprep.subr.bf16.mxu0 0
  %1025 = vmatpush2.bf16.msra.mxu0 0
  %1026 = vmatprep.subr.bf16.mxu0 0
  %1027 = vmatpush2.bf16.msra.mxu0 0
  %1028 = vmatprep.subr.bf16.mxu0 0
  %1029 = vmatpush2.bf16.msra.mxu0 0
  %1030 = vmatprep.subr.bf16.mxu0 0
  %1031 = vmatpush2.bf16.msra.mxu0 0
  %1032 = vmatprep.mubr.bf16.mxu0 0
  %1033 = vmatmul.mubr.bf16.gmra.mxu0 %v998
  %v1034 = vpop.f32.mrf.mxu0
  %v1035 = vadd.f32 0.0, %v1034
  %v1036 = vpop.f32.mrf.mxu0
  %v1037 = vpop.f32.mrf.mxu0
  %v1038 = vpop.f32.mrf.mxu0
  %1039 = vdwg.mxu0
  %1041 = vrot.lane.b32.xlu0 %v1035, 32
  %v1042 = vpop.permute.xlu0 %1041
  %v1044 = vadd.f32 %v984, %v1042
  %v1045 = vxor.u32 %v1044, 2147483648
  %v1046 = vmul.f32 %v1045, 1.442695
  %v1047 = vpow.pop %v1046
  %v1048 = vadd.f32 %v1047, 1.0
  %v1049 = vrcp.pop %v1048
  %v1050 = vmul.f32 1.0, %v1049
  %1052 = vrot.lane.b32.xlu0 %v941, 96
  %v1053 = vpop.permute.xlu0 %1052
  %v1055 = vmul.f32 %v995, %v1053
  %v1056 = vpack.c.bf16 %v1055, %v1055
  %1058 = vrot.lane.b32.xlu0 %v1056, 64
  %v1059 = vpop.permute.xlu0 %1058
  %v1061 = vsel %vm209, %v1059, 0
  %1063 = vmatprep.subr.bf16.mxu0 0
  %1064 = vmatpush1.bf16.msra.mxu0 0
  %1065 = vmatprep.subr.bf16.mxu0 0
  %1066 = vmatpush1.bf16.msra.mxu0 0
  %1067 = vmatprep.subr.bf16.mxu0 0
  %1068 = vmatpush1.bf16.msra.mxu0 0
  %1069 = vmatprep.subr.bf16.mxu0 0
  %1070 = vmatpush1.bf16.msra.mxu0 0
  %1071 = vmatprep.subr.bf16.mxu0 0
  %1072 = vmatpush1.bf16.msra.mxu0 0
  %1073 = vmatprep.subr.bf16.mxu0 0
  %1074 = vmatpush1.bf16.msra.mxu0 0
  %1075 = vmatprep.subr.bf16.mxu0 0
  %1076 = vmatpush1.bf16.msra.mxu0 %v345
  %1077 = vmatprep.subr.bf16.mxu0 0
  %1078 = vmatpush1.bf16.msra.mxu0 %v344
  %1079 = vmatprep.subr.bf16.mxu0 0
  %1080 = vmatpush2.bf16.msra.mxu0 0
  %1081 = vmatprep.subr.bf16.mxu0 0
  %1082 = vmatpush2.bf16.msra.mxu0 0
  %1083 = vmatprep.subr.bf16.mxu0 0
  %1084 = vmatpush2.bf16.msra.mxu0 0
  %1085 = vmatprep.subr.bf16.mxu0 0
  %1086 = vmatpush2.bf16.msra.mxu0 0
  %1087 = vmatprep.subr.bf16.mxu0 0
  %1088 = vmatpush2.bf16.msra.mxu0 0
  %1089 = vmatprep.subr.bf16.mxu0 0
  %1090 = vmatpush2.bf16.msra.mxu0 0
  %1091 = vmatprep.subr.bf16.mxu0 0
  %1092 = vmatpush2.bf16.msra.mxu0 0
  %1093 = vmatprep.subr.bf16.mxu0 0
  %1094 = vmatpush2.bf16.msra.mxu0 0
  %1095 = vmatprep.mubr.bf16.mxu0 0
  %1096 = vmatmul.mubr.bf16.gmra.mxu0 %v1061
  %v1097 = vpop.f32.mrf.mxu0
  %v1098 = vadd.f32 %v169, %v1097
  %v1099 = vpop.f32.mrf.mxu0
  %v1100 = vpop.f32.mrf.mxu0
  %v1101 = vpop.f32.mrf.mxu0
  %1102 = vdwg.mxu0
  %v1103 = vtanh.pop %v1098
  %v1104 = vsub.f32 1.0, %v995
  %1105 = vrot.lane.b32.xlu0 %v941, 64
  %v1106 = vpop.permute.xlu0 %1105
  %v1108 = vmul.f32 %v1050, %v1106
  %1110 = vrot.lane.b32.xlu0 %v1108, 64
  %v1111 = vpop.permute.xlu0 %1110
  %v1113 = vmul.f32 %v1104, %v1111
  %1115 = vrot.lane.b32.xlu0 %v1103, 96
  %v1116 = vpop.permute.xlu0 %1115
  %v1118 = vmul.f32 %v995, %v1116
  %v1119 = vadd.f32 %v1113, %v1118
  %v1120 = vpack.c.bf16 %v1119, %v1119
  %1122 = vrot.lane.b32.xlu0 %v1120, 32
  %v1123 = vpop.permute.xlu0 %1122
  %v1125 = vsel %vm209, %v1123, 0
  %1127 = vmatprep.subr.bf16.mxu0 0
  %1128 = vmatpush1.bf16.msra.mxu0 0
  %1129 = vmatprep.subr.bf16.mxu0 0
  %1130 = vmatpush1.bf16.msra.mxu0 0
  %1131 = vmatprep.subr.bf16.mxu0 0
  %1132 = vmatpush1.bf16.msra.mxu0 0
  %1133 = vmatprep.subr.bf16.mxu0 0
  %1134 = vmatpush1.bf16.msra.mxu0 0
  %1135 = vmatprep.subr.bf16.mxu0 0
  %1136 = vmatpush1.bf16.msra.mxu0 0
  %1137 = vmatprep.subr.bf16.mxu0 0
  %1138 = vmatpush1.bf16.msra.mxu0 0
  %1139 = vmatprep.subr.bf16.mxu0 0
  %1140 = vmatpush1.bf16.msra.mxu0 %v206
  %1141 = vmatprep.subr.bf16.mxu0 0
  %1142 = vmatpush1.bf16.msra.mxu0 %v205
  %1143 = vmatprep.subr.bf16.mxu0 0
  %1144 = vmatpush2.bf16.msra.mxu0 0
  %1145 = vmatprep.subr.bf16.mxu0 0
  %1146 = vmatpush2.bf16.msra.mxu0 0
  %1147 = vmatprep.subr.bf16.mxu0 0
  %1148 = vmatpush2.bf16.msra.mxu0 0
  %1149 = vmatprep.subr.bf16.mxu0 0
  %1150 = vmatpush2.bf16.msra.mxu0 0
  %1151 = vmatprep.subr.bf16.mxu0 0
  %1152 = vmatpush2.bf16.msra.mxu0 0
  %1153 = vmatprep.subr.bf16.mxu0 0
  %1154 = vmatpush2.bf16.msra.mxu0 0
  %1155 = vmatprep.subr.bf16.mxu0 0
  %1156 = vmatpush2.bf16.msra.mxu0 0
  %1157 = vmatprep.subr.bf16.mxu0 0
  %1158 = vmatpush2.bf16.msra.mxu0 0
  %1159 = vmatprep.mubr.bf16.mxu0 0
  %1160 = vmatmul.mubr.bf16.gmra.mxu0 %v1125
  %v1161 = vpop.f32.mrf.mxu0
  %v1162 = vadd.f32 %v173, %v1161
  %v1163 = vpop.f32.mrf.mxu0
  %v1164 = vpop.f32.mrf.mxu0
  %v1165 = vpop.f32.mrf.mxu0
  %1166 = vdwg.mxu0
  %v1167 = vtanh.pop %v1162
  %v1168 = vxor.u32 %v1162, 2147483648
  %v1169 = vmul.f32 %v1168, 1.442695
  %v1170 = vpow.pop %v1169
  %v1171 = vadd.f32 %v1170, 1.0
  %v1172 = vrcp.pop %v1171
  %v1173 = vmul.f32 1.0, %v1172
  %v1174 = vpack.c.bf16 %v1167, %v1167
  %v1176 = vsel %vm209, %v1174, 0
  %1178 = vmatprep.subr.bf16.mxu0 0
  %1179 = vmatpush1.bf16.msra.mxu0 0
  %1180 = vmatprep.subr.bf16.mxu0 0
  %1181 = vmatpush1.bf16.msra.mxu0 0
  %1182 = vmatprep.subr.bf16.mxu0 0
  %1183 = vmatpush1.bf16.msra.mxu0 0
  %1184 = vmatprep.subr.bf16.mxu0 0
  %1185 = vmatpush1.bf16.msra.mxu0 0
  %1186 = vmatprep.subr.bf16.mxu0 0
  %1187 = vmatpush1.bf16.msra.mxu0 0
  %1188 = vmatprep.subr.bf16.mxu0 0
  %1189 = vmatpush1.bf16.msra.mxu0 0
  %1190 = vmatprep.subr.bf16.mxu0 0
  %1191 = vmatpush1.bf16.msra.mxu0 %v270
  %1192 = vmatprep.subr.bf16.mxu0 0
  %1193 = vmatpush1.bf16.msra.mxu0 %v269
  %1194 = vmatprep.subr.bf16.mxu0 0
  %1195 = vmatpush2.bf16.msra.mxu0 0
  %1196 = vmatprep.subr.bf16.mxu0 0
  %1197 = vmatpush2.bf16.msra.mxu0 0
  %1198 = vmatprep.subr.bf16.mxu0 0
  %1199 = vmatpush2.bf16.msra.mxu0 0
  %1200 = vmatprep.subr.bf16.mxu0 0
  %1201 = vmatpush2.bf16.msra.mxu0 0
  %1202 = vmatprep.subr.bf16.mxu0 0
  %1203 = vmatpush2.bf16.msra.mxu0 0
  %1204 = vmatprep.subr.bf16.mxu0 0
  %1205 = vmatpush2.bf16.msra.mxu0 0
  %1206 = vmatprep.subr.bf16.mxu0 0
  %1207 = vmatpush2.bf16.msra.mxu0 0
  %1208 = vmatprep.subr.bf16.mxu0 0
  %1209 = vmatpush2.bf16.msra.mxu0 0
  %1210 = vmatprep.mubr.bf16.mxu0 0
  %1211 = vmatmul.mubr.bf16.gmra.mxu0 %v1176
  %v1212 = vpop.f32.mrf.mxu0
  %v1213 = vadd.f32 0.0, %v1212
  %v1214 = vpop.f32.mrf.mxu0
  %v1215 = vpop.f32.mrf.mxu0
  %v1216 = vpop.f32.mrf.mxu0
  %1217 = vdwg.mxu0
  %1219 = vrot.lane.b32.xlu0 %v1213, 32
  %v1220 = vpop.permute.xlu0 %1219
  %v1222 = vadd.f32 %v1162, %v1220
  %v1223 = vxor.u32 %v1222, 2147483648
  %v1224 = vmul.f32 %v1223, 1.442695
  %v1225 = vpow.pop %v1224
  %v1226 = vadd.f32 %v1225, 1.0
  %v1227 = vrcp.pop %v1226
  %v1228 = vmul.f32 1.0, %v1227
  %1230 = vrot.lane.b32.xlu0 %v1119, 96
  %v1231 = vpop.permute.xlu0 %1230
  %v1233 = vmul.f32 %v1173, %v1231
  %v1234 = vpack.c.bf16 %v1233, %v1233
  %1236 = vrot.lane.b32.xlu0 %v1234, 64
  %v1237 = vpop.permute.xlu0 %1236
  %v1239 = vsel %vm209, %v1237, 0
  %1241 = vmatprep.subr.bf16.mxu0 0
  %1242 = vmatpush1.bf16.msra.mxu0 0
  %1243 = vmatprep.subr.bf16.mxu0 0
  %1244 = vmatpush1.bf16.msra.mxu0 0
  %1245 = vmatprep.subr.bf16.mxu0 0
  %1246 = vmatpush1.bf16.msra.mxu0 0
  %1247 = vmatprep.subr.bf16.mxu0 0
  %1248 = vmatpush1.bf16.msra.mxu0 0
  %1249 = vmatprep.subr.bf16.mxu0 0
  %1250 = vmatpush1.bf16.msra.mxu0 0
  %1251 = vmatprep.subr.bf16.mxu0 0
  %1252 = vmatpush1.bf16.msra.mxu0 0
  %1253 = vmatprep.subr.bf16.mxu0 0
  %1254 = vmatpush1.bf16.msra.mxu0 %v345
  %1255 = vmatprep.subr.bf16.mxu0 0
  %1256 = vmatpush1.bf16.msra.mxu0 %v344
  %1257 = vmatprep.subr.bf16.mxu0 0
  %1258 = vmatpush2.bf16.msra.mxu0 0
  %1259 = vmatprep.subr.bf16.mxu0 0
  %1260 = vmatpush2.bf16.msra.mxu0 0
  %1261 = vmatprep.subr.bf16.mxu0 0
  %1262 = vmatpush2.bf16.msra.mxu0 0
  %1263 = vmatprep.subr.bf16.mxu0 0
  %1264 = vmatpush2.bf16.msra.mxu0 0
  %1265 = vmatprep.subr.bf16.mxu0 0
  %1266 = vmatpush2.bf16.msra.mxu0 0
  %1267 = vmatprep.subr.bf16.mxu0 0
  %1268 = vmatpush2.bf16.msra.mxu0 0
  %1269 = vmatprep.subr.bf16.mxu0 0
  %1270 = vmatpush2.bf16.msra.mxu0 0
  %1271 = vmatprep.subr.bf16.mxu0 0
  %1272 = vmatpush2.bf16.msra.mxu0 0
  %1273 = vmatprep.mubr.bf16.mxu0 0
  %1274 = vmatmul.mubr.bf16.gmra.mxu0 %v1239
  %v1275 = vpop.f32.mrf.mxu0
  %v1276 = vadd.f32 %v175, %v1275
  %v1277 = vpop.f32.mrf.mxu0
  %v1278 = vpop.f32.mrf.mxu0
  %v1279 = vpop.f32.mrf.mxu0
  %1280 = vdwg.mxu0
  %v1281 = vtanh.pop %v1276
  %v1282 = vsub.f32 1.0, %v1173
  %1283 = vrot.lane.b32.xlu0 %v1119, 64
  %v1284 = vpop.permute.xlu0 %1283
  %v1286 = vmul.f32 %v1228, %v1284
  %1288 = vrot.lane.b32.xlu0 %v1286, 64
  %v1289 = vpop.permute.xlu0 %1288
  %v1291 = vmul.f32 %v1282, %v1289
  %1293 = vrot.lane.b32.xlu0 %v1281, 96
  %v1294 = vpop.permute.xlu0 %1293
  %v1296 = vmul.f32 %v1173, %v1294
  %v1297 = vadd.f32 %v1291, %v1296
  %v1298 = vpack.c.bf16 %v1297, %v1297
  %1300 = vrot.lane.b32.xlu0 %v1298, 32
  %v1301 = vpop.permute.xlu0 %1300
  %v1303 = vsel %vm209, %v1301, 0
  %1305 = vmatprep.subr.bf16.mxu0 0
  %1306 = vmatpush1.bf16.msra.mxu0 0
  %1307 = vmatprep.subr.bf16.mxu0 0
  %1308 = vmatpush1.bf16.msra.mxu0 0
  %1309 = vmatprep.subr.bf16.mxu0 0
  %1310 = vmatpush1.bf16.msra.mxu0 0
  %1311 = vmatprep.subr.bf16.mxu0 0
  %1312 = vmatpush1.bf16.msra.mxu0 0
  %1313 = vmatprep.subr.bf16.mxu0 0
  %1314 = vmatpush1.bf16.msra.mxu0 0
  %1315 = vmatprep.subr.bf16.mxu0 0
  %1316 = vmatpush1.bf16.msra.mxu0 0
  %1317 = vmatprep.subr.bf16.mxu0 0
  %1318 = vmatpush1.bf16.msra.mxu0 %v206
  %1319 = vmatprep.subr.bf16.mxu0 0
  %1320 = vmatpush1.bf16.msra.mxu0 %v205
  %1321 = vmatprep.subr.bf16.mxu0 0
  %1322 = vmatpush2.bf16.msra.mxu0 0
  %1323 = vmatprep.subr.bf16.mxu0 0
  %1324 = vmatpush2.bf16.msra.mxu0 0
  %1325 = vmatprep.subr.bf16.mxu0 0
  %1326 = vmatpush2.bf16.msra.mxu0 0
  %1327 = vmatprep.subr.bf16.mxu0 0
  %1328 = vmatpush2.bf16.msra.mxu0 0
  %1329 = vmatprep.subr.bf16.mxu0 0
  %1330 = vmatpush2.bf16.msra.mxu0 0
  %1331 = vmatprep.subr.bf16.mxu0 0
  %1332 = vmatpush2.bf16.msra.mxu0 0
  %1333 = vmatprep.subr.bf16.mxu0 0
  %1334 = vmatpush2.bf16.msra.mxu0 0
  %1335 = vmatprep.subr.bf16.mxu0 0
  %1336 = vmatpush2.bf16.msra.mxu0 0
  %1337 = vmatprep.mubr.bf16.mxu0 0
  %1338 = vmatmul.mubr.bf16.gmra.mxu0 %v1303
  %v1339 = vpop.f32.mrf.mxu0
  %v1340 = vadd.f32 %v177, %v1339
  %v1341 = vpop.f32.mrf.mxu0
  %v1342 = vpop.f32.mrf.mxu0
  %v1343 = vpop.f32.mrf.mxu0
  %1344 = vdwg.mxu0
  %v1345 = vtanh.pop %v1340
  %v1346 = vxor.u32 %v1340, 2147483648
  %v1347 = vmul.f32 %v1346, 1.442695
  %v1348 = vpow.pop %v1347
  %v1349 = vadd.f32 %v1348, 1.0
  %v1350 = vrcp.pop %v1349
  %v1351 = vmul.f32 1.0, %v1350
  %v1352 = vpack.c.bf16 %v1345, %v1345
  %v1354 = vsel %vm209, %v1352, 0
  %1356 = vmatprep.subr.bf16.mxu0 0
  %1357 = vmatpush1.bf16.msra.mxu0 0
  %1358 = vmatprep.subr.bf16.mxu0 0
  %1359 = vmatpush1.bf16.msra.mxu0 0
  %1360 = vmatprep.subr.bf16.mxu0 0
  %1361 = vmatpush1.bf16.msra.mxu0 0
  %1362 = vmatprep.subr.bf16.mxu0 0
  %1363 = vmatpush1.bf16.msra.mxu0 0
  %1364 = vmatprep.subr.bf16.mxu0 0
  %1365 = vmatpush1.bf16.msra.mxu0 0
  %1366 = vmatprep.subr.bf16.mxu0 0
  %1367 = vmatpush1.bf16.msra.mxu0 0
  %1368 = vmatprep.subr.bf16.mxu0 0
  %1369 = vmatpush1.bf16.msra.mxu0 %v270
  %1370 = vmatprep.subr.bf16.mxu0 0
  %1371 = vmatpush1.bf16.msra.mxu0 %v269
  %1372 = vmatprep.subr.bf16.mxu0 0
  %1373 = vmatpush2.bf16.msra.mxu0 0
  %1374 = vmatprep.subr.bf16.mxu0 0
  %1375 = vmatpush2.bf16.msra.mxu0 0
  %1376 = vmatprep.subr.bf16.mxu0 0
  %1377 = vmatpush2.bf16.msra.mxu0 0
  %1378 = vmatprep.subr.bf16.mxu0 0
  %1379 = vmatpush2.bf16.msra.mxu0 0
  %1380 = vmatprep.subr.bf16.mxu0 0
  %1381 = vmatpush2.bf16.msra.mxu0 0
  %1382 = vmatprep.subr.bf16.mxu0 0
  %1383 = vmatpush2.bf16.msra.mxu0 0
  %1384 = vmatprep.subr.bf16.mxu0 0
  %1385 = vmatpush2.bf16.msra.mxu0 0
  %1386 = vmatprep.subr.bf16.mxu0 0
  %1387 = vmatpush2.bf16.msra.mxu0 0
  %1388 = vmatprep.mubr.bf16.mxu0 0
  %1389 = vmatmul.mubr.bf16.gmra.mxu0 %v1354
  %v1390 = vpop.f32.mrf.mxu0
  %v1391 = vadd.f32 0.0, %v1390
  %v1392 = vpop.f32.mrf.mxu0
  %v1393 = vpop.f32.mrf.mxu0
  %v1394 = vpop.f32.mrf.mxu0
  %1395 = vdwg.mxu0
  %1397 = vrot.lane.b32.xlu0 %v1391, 32
  %v1398 = vpop.permute.xlu0 %1397
  %v1400 = vadd.f32 %v1340, %v1398
  %v1401 = vxor.u32 %v1400, 2147483648
  %v1402 = vmul.f32 %v1401, 1.442695
  %v1403 = vpow.pop %v1402
  %v1404 = vadd.f32 %v1403, 1.0
  %v1405 = vrcp.pop %v1404
  %v1406 = vmul.f32 1.0, %v1405
  %1408 = vrot.lane.b32.xlu0 %v1297, 96
  %v1409 = vpop.permute.xlu0 %1408
  %v1411 = vmul.f32 %v1351, %v1409
  %v1412 = vpack.c.bf16 %v1411, %v1411
  %1414 = vrot.lane.b32.xlu0 %v1412, 64
  %v1415 = vpop.permute.xlu0 %1414
  %v1417 = vsel %vm209, %v1415, 0
  %1419 = vmatprep.subr.bf16.mxu0 0
  %1420 = vmatpush1.bf16.msra.mxu0 0
  %1421 = vmatprep.subr.bf16.mxu0 0
  %1422 = vmatpush1.bf16.msra.mxu0 0
  %1423 = vmatprep.subr.bf16.mxu0 0
  %1424 = vmatpush1.bf16.msra.mxu0 0
  %1425 = vmatprep.subr.bf16.mxu0 0
  %1426 = vmatpush1.bf16.msra.mxu0 0
  %1427 = vmatprep.subr.bf16.mxu0 0
  %1428 = vmatpush1.bf16.msra.mxu0 0
  %1429 = vmatprep.subr.bf16.mxu0 0
  %1430 = vmatpush1.bf16.msra.mxu0 0
  %1431 = vmatprep.subr.bf16.mxu0 0
  %1432 = vmatpush1.bf16.msra.mxu0 %v345
  %1433 = vmatprep.subr.bf16.mxu0 0
  %1434 = vmatpush1.bf16.msra.mxu0 %v344
  %1435 = vmatprep.subr.bf16.mxu0 0
  %1436 = vmatpush2.bf16.msra.mxu0 0
  %1437 = vmatprep.subr.bf16.mxu0 0
  %1438 = vmatpush2.bf16.msra.mxu0 0
  %1439 = vmatprep.subr.bf16.mxu0 0
  %1440 = vmatpush2.bf16.msra.mxu0 0
  %1441 = vmatprep.subr.bf16.mxu0 0
  %1442 = vmatpush2.bf16.msra.mxu0 0
  %1443 = vmatprep.subr.bf16.mxu0 0
  %1444 = vmatpush2.bf16.msra.mxu0 0
  %1445 = vmatprep.subr.bf16.mxu0 0
  %1446 = vmatpush2.bf16.msra.mxu0 0
  %1447 = vmatprep.subr.bf16.mxu0 0
  %1448 = vmatpush2.bf16.msra.mxu0 0
  %1449 = vmatprep.subr.bf16.mxu0 0
  %1450 = vmatpush2.bf16.msra.mxu0 0
  %1451 = vmatprep.mubr.bf16.mxu0 0
  %1452 = vmatmul.mubr.bf16.gmra.mxu0 %v1417
  %v1453 = vpop.f32.mrf.mxu0
  %v1454 = vadd.f32 %v179, %v1453
  %v1455 = vpop.f32.mrf.mxu0
  %v1456 = vpop.f32.mrf.mxu0
  %v1457 = vpop.f32.mrf.mxu0
  %1458 = vdwg.mxu0
  %v1459 = vtanh.pop %v1454
  %v1460 = vsub.f32 1.0, %v1351
  %1461 = vrot.lane.b32.xlu0 %v1297, 64
  %v1462 = vpop.permute.xlu0 %1461
  %v1464 = vmul.f32 %v1406, %v1462
  %1466 = vrot.lane.b32.xlu0 %v1464, 64
  %v1467 = vpop.permute.xlu0 %1466
  %v1469 = vmul.f32 %v1460, %v1467
  %1471 = vrot.lane.b32.xlu0 %v1459, 96
  %v1472 = vpop.permute.xlu0 %1471
  %v1474 = vmul.f32 %v1351, %v1472
  %v1475 = vadd.f32 %v1469, %v1474
  %v1476 = vld [vmem:[%s6] sm:$0x1]
  %v1478 = vlaneseq
  %v1479 = vshrl.u32 %v1478, 7
  %v1480 = vsub.s32 0, %v1479
  %v1481 = vrot.slane %v1476, %v1480
  %1482 = vrot.lane.b32.xlu0 %v1481, 96
  %v1483 = vpop.permute.xlu0 %1482
  %v1485 = vmul.f32 %v1475, %v1483
  %1487 = vrot.lane.b32.xlu0 %v1485, 32
  %v1488 = vpop.permute.xlu0 %1487
  %v1490 = vsel %vm209, %v1488, 0.0
  %1491 = vadd.xlane.f32.xlu0 %v1490
  %v1492 = vpop.xlane.xlu0 %1491
  %v1493 = vld [vmem:[#allocation2] sm:$0x1]
  %v1495 = vlaneseq
  %v1496 = vshrl.u32 %v1495, 7
  %v1497 = vsub.s32 0, %v1496
  %v1498 = vrot.slane %v1493, %v1497
  %v1500 = vadd.f32 %v1492, %v1498
  %v1501 = vxor.u32 %v1500, 2147483648
  %v1502 = vmul.f32 %v1501, 1.442695
  %v1503 = vpow.pop %v1502
  %v1504 = vadd.f32 %v1503, 1.0
  %v1505 = vrcp.pop %v1504
  %v1506 = vmul.f32 1.0, %v1505
  %vm1507 = vcmask 7168
  %1508 = vst.msk [vmem:[%s8] sm:$0xff] %vm1507, %v1506
  // Predicated region
  $region34: #{tpu_custom_call.1} parent=0 // pred_check
    _
  $region35: #{tpu_custom_call.1} parent=0 // pred_check_branch
    %1510 = sbr.rel (0) target = $region37
  $region36: #{tpu_custom_call.1} parent=0 // pred_region
    _
  $region37: #{tpu_custom_call.1} parent=0 // pred_fallthru
    _
  // Predicated region
  $region38: #{tpu_custom_call.1} parent=0 // pred_check
    _
  $region39: #{tpu_custom_call.1} parent=0 // pred_check_branch
    %1512 = sbr.rel (0) target = $region41
  $region40: #{tpu_custom_call.1} parent=0 // pred_region
    _
  $region41: #{tpu_custom_call.1} parent=0 // pred_fallthru
    _

</llo_original>
